<compile_context>
chip_gen: v7x
topology: tpu7x:2x2x1
jax: 0.10.0
libtpu: 0.0.40
codegen_flags: <defaults>
</compile_context>

<pallas_src>
import functools

import jax
import jax.numpy as jnp
import numpy as np
from jax import lax
from jax.experimental import pallas as pl
from jax.experimental.pallas import tpu as pltpu


def _crop_kernel(shifts_ref, xp_ref, o_ref, *, pad, h, w, nb):
    """Crop an (nb, C, Hp, Wp) replicate-padded block to (nb, C, h, w)."""
    blk = pl.program_id(0)

    def one_image(b, carry):
        img = blk * nb + b
        sx = shifts_ref[img, 0]   # width shift,  in [0, 2*pad]
        sy = shifts_ref[img, 1]   # height shift, in [0, 2*pad]

        # Row shift: dynamic sublane slice straight off the padded VMEM block.
        rows = xp_ref[b, :, pl.ds(sy, h), :]          # (C, h, Wp)

        # Column shift: branch-free select over the 2*pad+1 static lane offsets.
        out = rows[:, :, 0:w]
        for k in range(1, 2 * pad + 1):
            out = jnp.where(sx == k, rows[:, :, k:k + w], out)

        o_ref[b] = out
        return carry

    lax.fori_loop(0, nb, one_image, 0, unroll=True)


def _pick_block_images(n, c, hp, wp, itemsize, vmem_budget_bytes):
    # Pallas double-buffers the input block and the output block: ~4 block-sized
    # VMEM buffers live at once.  Keep them under the budget (conservative for
    # v7x's 64 MiB VMEM / 32 MiB scoped default).
    per_img = 4 * c * hp * wp * itemsize
    max_nb = max(1, vmem_budget_bytes // per_img)
    if n >= 2:
        # Keep at least 2 grid steps so "parallel" can use both v7x TensorCores.
        max_nb = min(max_nb, n // 2)
    max_nb = min(max_nb, n)
    for cand in range(int(max_nb), 0, -1):
        if n % cand == 0:
            return cand
    return 1


def random_shifts_aug(x, key, pad, *, vmem_budget_bytes=4 << 20):
    """JAX/Pallas equivalent of RandomShiftsAug(pad)(x); x is NCHW."""
    n, c, h, w = x.shape
    assert h == w
    # One integer (sx, sy) pair per image, uniform in {0, ..., 2*pad}
    # (same distribution as torch.randint(0, 2*pad+1, (n, 1, 1, 2))).
    shifts = jax.random.randint(key, (n, 2), 0, 2 * pad + 1, dtype=jnp.int32)

    # Replicate-pad once in the wrapper (cheap, XLA handles it); the kernel then
    # only moves data.
    xp = jnp.pad(x, ((0, 0), (0, 0), (pad, pad), (pad, pad)), mode='edge')
    hp, wp = h + 2 * pad, w + 2 * pad

    nb = _pick_block_images(n, c, hp, wp, x.dtype.itemsize, vmem_budget_bytes)
    grid = (n // nb,)

    kernel = functools.partial(_crop_kernel, pad=pad, h=h, w=w, nb=nb)
    out = pl.pallas_call(
        kernel,
        out_shape=jax.ShapeDtypeStruct((n, c, h, w), x.dtype),
        grid_spec=pltpu.PrefetchScalarGridSpec(
            num_scalar_prefetch=1,
            grid=grid,
            in_specs=[pl.BlockSpec((nb, c, hp, wp), lambda i, shifts: (i, 0, 0, 0))],
            out_specs=pl.BlockSpec((nb, c, h, w), lambda i, shifts: (i, 0, 0, 0)),
        ),
        compiler_params=pltpu.CompilerParams(
            dimension_semantics=("parallel",),
            vmem_limit_bytes=32 * 1024 * 1024,
        ),
    )(shifts, xp)
    return out, shifts


def _reference(x, shifts, pad):
    """Pure-JAX reference: replicate pad + integer crop (== the torch forward)."""
    n, c, h, w = x.shape
    xp = jnp.pad(x, ((0, 0), (0, 0), (pad, pad), (pad, pad)), mode='edge')

    def crop_one(img, sh):
        sx, sy = sh[0], sh[1]
        return lax.dynamic_slice(img, (0, sy, sx), (c, h, w))

    return jax.vmap(crop_one)(xp, shifts)


if __name__ == "__main__":
    PAD = 4
    N, C, H, W = 8, 4, 16, 16   # small, but enough images to exercise batched blocks

    key = jax.random.PRNGKey(0)
    kx, ks = jax.random.split(key)
    x = jax.random.normal(kx, (N, C, H, W), dtype=jnp.float32)

    out, shifts = random_shifts_aug(x, ks, PAD)
    out = jax.block_until_ready(out)

    ref = _reference(x, shifts, PAD)
    np.testing.assert_allclose(np.asarray(out), np.asarray(ref), rtol=1e-6, atol=1e-6)

    print("KERNEL_OK")
</pallas_src>

<mosaic_0001>
module attributes {stable_mosaic.version = 11 : i64} {
  func.func @_crop_kernel(%arg0: i32, %arg1: memref<8x2xi32, #tpu.memory_space<smem>>, %arg2: memref<4x4x24x24xf32, #tpu.memory_space<vmem>>, %arg3: memref<4x4x16x16xf32, #tpu.memory_space<vmem>>) attributes {dimension_semantics = [#tpu.dimension_semantics<parallel>], iteration_bounds = array<i64: 2>, scalar_prefetch = 1 : i64, scratch_operands = 0 : i64, tpu.core_type = #tpu.core_type<tc>, window_params = [{transform_indices = @transform_0, window_bounds = array<i64: 4, 4, 24, 24>}, {transform_indices = @transform_1, window_bounds = array<i64: 4, 4, 16, 16>}]} {
    %c0_i32 = arith.constant 0 : i32
    %c4_i32 = arith.constant 4 : i32
    %0 = arith.muli %arg0, %c4_i32 : i32
    %1 = arith.addi %0, %c0_i32 : i32
    %2 = arith.index_cast %1 : i32 to index
    %c0 = arith.constant 0 : index
    %3 = memref.load %arg1[%2, %c0] : memref<8x2xi32, #tpu.memory_space<smem>>
    %4 = arith.index_cast %1 : i32 to index
    %c1 = arith.constant 1 : index
    %5 = memref.load %arg1[%4, %c1] : memref<8x2xi32, #tpu.memory_space<smem>>
    %6 = arith.index_cast %c0_i32 : i32 to index
    %c0_0 = arith.constant 0 : index
    %7 = arith.index_cast %5 : i32 to index
    %c0_1 = arith.constant 0 : index
    %8 = vector.load %arg2[%6, %c0_0, %7, %c0_1] : memref<4x4x24x24xf32, #tpu.memory_space<vmem>>, vector<1x4x16x24xf32>
    %9 = vector.shape_cast %8 : vector<1x4x16x24xf32> to vector<4x16x24xf32>
    %10 = vector.extract_strided_slice %9 {offsets = [0, 0, 0], sizes = [4, 16, 16], strides = [1, 1, 1]} : vector<4x16x24xf32> to vector<4x16x16xf32>
    %c1_i32 = arith.constant 1 : i32
    %11 = arith.cmpi eq, %3, %c1_i32 : i32
    %12 = vector.extract_strided_slice %9 {offsets = [0, 0, 1], sizes = [4, 16, 16], strides = [1, 1, 1]} : vector<4x16x24xf32> to vector<4x16x16xf32>
    %13 = arith.select %11, %12, %10 : vector<4x16x16xf32>
    %c2_i32 = arith.constant 2 : i32
    %14 = arith.cmpi eq, %3, %c2_i32 : i32
    %15 = vector.extract_strided_slice %9 {offsets = [0, 0, 2], sizes = [4, 16, 16], strides = [1, 1, 1]} : vector<4x16x24xf32> to vector<4x16x16xf32>
    %16 = arith.select %14, %15, %13 : vector<4x16x16xf32>
    %c3_i32 = arith.constant 3 : i32
    %17 = arith.cmpi eq, %3, %c3_i32 : i32
    %18 = vector.extract_strided_slice %9 {offsets = [0, 0, 3], sizes = [4, 16, 16], strides = [1, 1, 1]} : vector<4x16x24xf32> to vector<4x16x16xf32>
    %19 = arith.select %17, %18, %16 : vector<4x16x16xf32>
    %c4_i32_2 = arith.constant 4 : i32
    %20 = arith.cmpi eq, %3, %c4_i32_2 : i32
    %21 = vector.extract_strided_slice %9 {offsets = [0, 0, 4], sizes = [4, 16, 16], strides = [1, 1, 1]} : vector<4x16x24xf32> to vector<4x16x16xf32>
    %22 = arith.select %20, %21, %19 : vector<4x16x16xf32>
    %c5_i32 = arith.constant 5 : i32
    %23 = arith.cmpi eq, %3, %c5_i32 : i32
    %24 = vector.extract_strided_slice %9 {offsets = [0, 0, 5], sizes = [4, 16, 16], strides = [1, 1, 1]} : vector<4x16x24xf32> to vector<4x16x16xf32>
    %25 = arith.select %23, %24, %22 : vector<4x16x16xf32>
    %c6_i32 = arith.constant 6 : i32
    %26 = arith.cmpi eq, %3, %c6_i32 : i32
    %27 = vector.extract_strided_slice %9 {offsets = [0, 0, 6], sizes = [4, 16, 16], strides = [1, 1, 1]} : vector<4x16x24xf32> to vector<4x16x16xf32>
    %28 = arith.select %26, %27, %25 : vector<4x16x16xf32>
    %c7_i32 = arith.constant 7 : i32
    %29 = arith.cmpi eq, %3, %c7_i32 : i32
    %30 = vector.extract_strided_slice %9 {offsets = [0, 0, 7], sizes = [4, 16, 16], strides = [1, 1, 1]} : vector<4x16x24xf32> to vector<4x16x16xf32>
    %31 = arith.select %29, %30, %28 : vector<4x16x16xf32>
    %c8_i32 = arith.constant 8 : i32
    %32 = arith.cmpi eq, %3, %c8_i32 : i32
    %33 = vector.extract_strided_slice %9 {offsets = [0, 0, 8], sizes = [4, 16, 16], strides = [1, 1, 1]} : vector<4x16x24xf32> to vector<4x16x16xf32>
    %34 = arith.select %32, %33, %31 : vector<4x16x16xf32>
    %35 = arith.index_cast %c0_i32 : i32 to index
    %c0_3 = arith.constant 0 : index
    %c0_4 = arith.constant 0 : index
    %c0_5 = arith.constant 0 : index
    %36 = vector.load %arg3[%35, %c0_3, %c0_4, %c0_5] : memref<4x4x16x16xf32, #tpu.memory_space<vmem>>, vector<1x4x16x16xf32>
    %37 = vector.shape_cast %36 : vector<1x4x16x16xf32> to vector<4x16x16xf32>
    %38 = vector.shape_cast %34 : vector<4x16x16xf32> to vector<1x4x16x16xf32>
    tpu.vector_store %arg3[%35, %c0_3, %c0_4, %c0_5], %38 {strides = array<i32>} : memref<4x4x16x16xf32, #tpu.memory_space<vmem>>, vector<1x4x16x16xf32>,
    %c1_i32_6 = arith.constant 1 : i32
    %c4_i32_7 = arith.constant 4 : i32
    %39 = arith.muli %arg0, %c4_i32_7 : i32
    %40 = arith.addi %39, %c1_i32_6 : i32
    %41 = arith.index_cast %40 : i32 to index
    %c0_8 = arith.constant 0 : index
    %42 = memref.load %arg1[%41, %c0_8] : memref<8x2xi32, #tpu.memory_space<smem>>
    %43 = arith.index_cast %40 : i32 to index
    %c1_9 = arith.constant 1 : index
    %44 = memref.load %arg1[%43, %c1_9] : memref<8x2xi32, #tpu.memory_space<smem>>
    %45 = arith.index_cast %c1_i32_6 : i32 to index
    %c0_10 = arith.constant 0 : index
    %46 = arith.index_cast %44 : i32 to index
    %c0_11 = arith.constant 0 : index
    %47 = vector.load %arg2[%45, %c0_10, %46, %c0_11] : memref<4x4x24x24xf32, #tpu.memory_space<vmem>>, vector<1x4x16x24xf32>
    %48 = vector.shape_cast %47 : vector<1x4x16x24xf32> to vector<4x16x24xf32>
    %49 = vector.extract_strided_slice %48 {offsets = [0, 0, 0], sizes = [4, 16, 16], strides = [1, 1, 1]} : vector<4x16x24xf32> to vector<4x16x16xf32>
    %c1_i32_12 = arith.constant 1 : i32
    %50 = arith.cmpi eq, %42, %c1_i32_12 : i32
    %51 = vector.extract_strided_slice %48 {offsets = [0, 0, 1], sizes = [4, 16, 16], strides = [1, 1, 1]} : vector<4x16x24xf32> to vector<4x16x16xf32>
    %52 = arith.select %50, %51, %49 : vector<4x16x16xf32>
    %c2_i32_13 = arith.constant 2 : i32
    %53 = arith.cmpi eq, %42, %c2_i32_13 : i32
    %54 = vector.extract_strided_slice %48 {offsets = [0, 0, 2], sizes = [4, 16, 16], strides = [1, 1, 1]} : vector<4x16x24xf32> to vector<4x16x16xf32>
    %55 = arith.select %53, %54, %52 : vector<4x16x16xf32>
    %c3_i32_14 = arith.constant 3 : i32
    %56 = arith.cmpi eq, %42, %c3_i32_14 : i32
    %57 = vector.extract_strided_slice %48 {offsets = [0, 0, 3], sizes = [4, 16, 16], strides = [1, 1, 1]} : vector<4x16x24xf32> to vector<4x16x16xf32>
    %58 = arith.select %56, %57, %55 : vector<4x16x16xf32>
    %c4_i32_15 = arith.constant 4 : i32
    %59 = arith.cmpi eq, %42, %c4_i32_15 : i32
    %60 = vector.extract_strided_slice %48 {offsets = [0, 0, 4], sizes = [4, 16, 16], strides = [1, 1, 1]} : vector<4x16x24xf32> to vector<4x16x16xf32>
    %61 = arith.select %59, %60, %58 : vector<4x16x16xf32>
    %c5_i32_16 = arith.constant 5 : i32
    %62 = arith.cmpi eq, %42, %c5_i32_16 : i32
    %63 = vector.extract_strided_slice %48 {offsets = [0, 0, 5], sizes = [4, 16, 16], strides = [1, 1, 1]} : vector<4x16x24xf32> to vector<4x16x16xf32>
    %64 = arith.select %62, %63, %61 : vector<4x16x16xf32>
    %c6_i32_17 = arith.constant 6 : i32
    %65 = arith.cmpi eq, %42, %c6_i32_17 : i32
    %66 = vector.extract_strided_slice %48 {offsets = [0, 0, 6], sizes = [4, 16, 16], strides = [1, 1, 1]} : vector<4x16x24xf32> to vector<4x16x16xf32>
    %67 = arith.select %65, %66, %64 : vector<4x16x16xf32>
    %c7_i32_18 = arith.constant 7 : i32
    %68 = arith.cmpi eq, %42, %c7_i32_18 : i32
    %69 = vector.extract_strided_slice %48 {offsets = [0, 0, 7], sizes = [4, 16, 16], strides = [1, 1, 1]} : vector<4x16x24xf32> to vector<4x16x16xf32>
    %70 = arith.select %68, %69, %67 : vector<4x16x16xf32>
    %c8_i32_19 = arith.constant 8 : i32
    %71 = arith.cmpi eq, %42, %c8_i32_19 : i32
    %72 = vector.extract_strided_slice %48 {offsets = [0, 0, 8], sizes = [4, 16, 16], strides = [1, 1, 1]} : vector<4x16x24xf32> to vector<4x16x16xf32>
    %73 = arith.select %71, %72, %70 : vector<4x16x16xf32>
    %74 = arith.index_cast %c1_i32_6 : i32 to index
    %c0_20 = arith.constant 0 : index
    %c0_21 = arith.constant 0 : index
    %c0_22 = arith.constant 0 : index
    %75 = vector.load %arg3[%74, %c0_20, %c0_21, %c0_22] : memref<4x4x16x16xf32, #tpu.memory_space<vmem>>, vector<1x4x16x16xf32>
    %76 = vector.shape_cast %75 : vector<1x4x16x16xf32> to vector<4x16x16xf32>
    %77 = vector.shape_cast %73 : vector<4x16x16xf32> to vector<1x4x16x16xf32>
    tpu.vector_store %arg3[%74, %c0_20, %c0_21, %c0_22], %77 {strides = array<i32>} : memref<4x4x16x16xf32, #tpu.memory_space<vmem>>, vector<1x4x16x16xf32>,
    %c2_i32_23 = arith.constant 2 : i32
    %c4_i32_24 = arith.constant 4 : i32
    %78 = arith.muli %arg0, %c4_i32_24 : i32
    %79 = arith.addi %78, %c2_i32_23 : i32
    %80 = arith.index_cast %79 : i32 to index
    %c0_25 = arith.constant 0 : index
    %81 = memref.load %arg1[%80, %c0_25] : memref<8x2xi32, #tpu.memory_space<smem>>
    %82 = arith.index_cast %79 : i32 to index
    %c1_26 = arith.constant 1 : index
    %83 = memref.load %arg1[%82, %c1_26] : memref<8x2xi32, #tpu.memory_space<smem>>
    %84 = arith.index_cast %c2_i32_23 : i32 to index
    %c0_27 = arith.constant 0 : index
    %85 = arith.index_cast %83 : i32 to index
    %c0_28 = arith.constant 0 : index
    %86 = vector.load %arg2[%84, %c0_27, %85, %c0_28] : memref<4x4x24x24xf32, #tpu.memory_space<vmem>>, vector<1x4x16x24xf32>
    %87 = vector.shape_cast %86 : vector<1x4x16x24xf32> to vector<4x16x24xf32>
    %88 = vector.extract_strided_slice %87 {offsets = [0, 0, 0], sizes = [4, 16, 16], strides = [1, 1, 1]} : vector<4x16x24xf32> to vector<4x16x16xf32>
    %c1_i32_29 = arith.constant 1 : i32
    %89 = arith.cmpi eq, %81, %c1_i32_29 : i32
    %90 = vector.extract_strided_slice %87 {offsets = [0, 0, 1], sizes = [4, 16, 16], strides = [1, 1, 1]} : vector<4x16x24xf32> to vector<4x16x16xf32>
    %91 = arith.select %89, %90, %88 : vector<4x16x16xf32>
    %c2_i32_30 = arith.constant 2 : i32
    %92 = arith.cmpi eq, %81, %c2_i32_30 : i32
    %93 = vector.extract_strided_slice %87 {offsets = [0, 0, 2], sizes = [4, 16, 16], strides = [1, 1, 1]} : vector<4x16x24xf32> to vector<4x16x16xf32>
    %94 = arith.select %92, %93, %91 : vector<4x16x16xf32>
    %c3_i32_31 = arith.constant 3 : i32
    %95 = arith.cmpi eq, %81, %c3_i32_31 : i32
    %96 = vector.extract_strided_slice %87 {offsets = [0, 0, 3], sizes = [4, 16, 16], strides = [1, 1, 1]} : vector<4x16x24xf32> to vector<4x16x16xf32>
    %97 = arith.select %95, %96, %94 : vector<4x16x16xf32>
    %c4_i32_32 = arith.constant 4 : i32
    %98 = arith.cmpi eq, %81, %c4_i32_32 : i32
    %99 = vector.extract_strided_slice %87 {offsets = [0, 0, 4], sizes = [4, 16, 16], strides = [1, 1, 1]} : vector<4x16x24xf32> to vector<4x16x16xf32>
    %100 = arith.select %98, %99, %97 : vector<4x16x16xf32>
    %c5_i32_33 = arith.constant 5 : i32
    %101 = arith.cmpi eq, %81, %c5_i32_33 : i32
    %102 = vector.extract_strided_slice %87 {offsets = [0, 0, 5], sizes = [4, 16, 16], strides = [1, 1, 1]} : vector<4x16x24xf32> to vector<4x16x16xf32>
    %103 = arith.select %101, %102, %100 : vector<4x16x16xf32>
    %c6_i32_34 = arith.constant 6 : i32
    %104 = arith.cmpi eq, %81, %c6_i32_34 : i32
    %105 = vector.extract_strided_slice %87 {offsets = [0, 0, 6], sizes = [4, 16, 16], strides = [1, 1, 1]} : vector<4x16x24xf32> to vector<4x16x16xf32>
    %106 = arith.select %104, %105, %103 : vector<4x16x16xf32>
    %c7_i32_35 = arith.constant 7 : i32
    %107 = arith.cmpi eq, %81, %c7_i32_35 : i32
    %108 = vector.extract_strided_slice %87 {offsets = [0, 0, 7], sizes = [4, 16, 16], strides = [1, 1, 1]} : vector<4x16x24xf32> to vector<4x16x16xf32>
    %109 = arith.select %107, %108, %106 : vector<4x16x16xf32>
    %c8_i32_36 = arith.constant 8 : i32
    %110 = arith.cmpi eq, %81, %c8_i32_36 : i32
    %111 = vector.extract_strided_slice %87 {offsets = [0, 0, 8], sizes = [4, 16, 16], strides = [1, 1, 1]} : vector<4x16x24xf32> to vector<4x16x16xf32>
    %112 = arith.select %110, %111, %109 : vector<4x16x16xf32>
    %113 = arith.index_cast %c2_i32_23 : i32 to index
    %c0_37 = arith.constant 0 : index
    %c0_38 = arith.constant 0 : index
    %c0_39 = arith.constant 0 : index
    %114 = vector.load %arg3[%113, %c0_37, %c0_38, %c0_39] : memref<4x4x16x16xf32, #tpu.memory_space<vmem>>, vector<1x4x16x16xf32>
    %115 = vector.shape_cast %114 : vector<1x4x16x16xf32> to vector<4x16x16xf32>
    %116 = vector.shape_cast %112 : vector<4x16x16xf32> to vector<1x4x16x16xf32>
    tpu.vector_store %arg3[%113, %c0_37, %c0_38, %c0_39], %116 {strides = array<i32>} : memref<4x4x16x16xf32, #tpu.memory_space<vmem>>, vector<1x4x16x16xf32>,
    %c3_i32_40 = arith.constant 3 : i32
    %c4_i32_41 = arith.constant 4 : i32
    %117 = arith.muli %arg0, %c4_i32_41 : i32
    %118 = arith.addi %117, %c3_i32_40 : i32
    %119 = arith.index_cast %118 : i32 to index
    %c0_42 = arith.constant 0 : index
    %120 = memref.load %arg1[%119, %c0_42] : memref<8x2xi32, #tpu.memory_space<smem>>
    %121 = arith.index_cast %118 : i32 to index
    %c1_43 = arith.constant 1 : index
    %122 = memref.load %arg1[%121, %c1_43] : memref<8x2xi32, #tpu.memory_space<smem>>
    %123 = arith.index_cast %c3_i32_40 : i32 to index
    %c0_44 = arith.constant 0 : index
    %124 = arith.index_cast %122 : i32 to index
    %c0_45 = arith.constant 0 : index
    %125 = vector.load %arg2[%123, %c0_44, %124, %c0_45] : memref<4x4x24x24xf32, #tpu.memory_space<vmem>>, vector<1x4x16x24xf32>
    %126 = vector.shape_cast %125 : vector<1x4x16x24xf32> to vector<4x16x24xf32>
    %127 = vector.extract_strided_slice %126 {offsets = [0, 0, 0], sizes = [4, 16, 16], strides = [1, 1, 1]} : vector<4x16x24xf32> to vector<4x16x16xf32>
    %c1_i32_46 = arith.constant 1 : i32
    %128 = arith.cmpi eq, %120, %c1_i32_46 : i32
    %129 = vector.extract_strided_slice %126 {offsets = [0, 0, 1], sizes = [4, 16, 16], strides = [1, 1, 1]} : vector<4x16x24xf32> to vector<4x16x16xf32>
    %130 = arith.select %128, %129, %127 : vector<4x16x16xf32>
    %c2_i32_47 = arith.constant 2 : i32
    %131 = arith.cmpi eq, %120, %c2_i32_47 : i32
    %132 = vector.extract_strided_slice %126 {offsets = [0, 0, 2], sizes = [4, 16, 16], strides = [1, 1, 1]} : vector<4x16x24xf32> to vector<4x16x16xf32>
    %133 = arith.select %131, %132, %130 : vector<4x16x16xf32>
    %c3_i32_48 = arith.constant 3 : i32
    %134 = arith.cmpi eq, %120, %c3_i32_48 : i32
    %135 = vector.extract_strided_slice %126 {offsets = [0, 0, 3], sizes = [4, 16, 16], strides = [1, 1, 1]} : vector<4x16x24xf32> to vector<4x16x16xf32>
    %136 = arith.select %134, %135, %133 : vector<4x16x16xf32>
    %c4_i32_49 = arith.constant 4 : i32
    %137 = arith.cmpi eq, %120, %c4_i32_49 : i32
    %138 = vector.extract_strided_slice %126 {offsets = [0, 0, 4], sizes = [4, 16, 16], strides = [1, 1, 1]} : vector<4x16x24xf32> to vector<4x16x16xf32>
    %139 = arith.select %137, %138, %136 : vector<4x16x16xf32>
    %c5_i32_50 = arith.constant 5 : i32
    %140 = arith.cmpi eq, %120, %c5_i32_50 : i32
    %141 = vector.extract_strided_slice %126 {offsets = [0, 0, 5], sizes = [4, 16, 16], strides = [1, 1, 1]} : vector<4x16x24xf32> to vector<4x16x16xf32>
    %142 = arith.select %140, %141, %139 : vector<4x16x16xf32>
    %c6_i32_51 = arith.constant 6 : i32
    %143 = arith.cmpi eq, %120, %c6_i32_51 : i32
    %144 = vector.extract_strided_slice %126 {offsets = [0, 0, 6], sizes = [4, 16, 16], strides = [1, 1, 1]} : vector<4x16x24xf32> to vector<4x16x16xf32>
    %145 = arith.select %143, %144, %142 : vector<4x16x16xf32>
    %c7_i32_52 = arith.constant 7 : i32
    %146 = arith.cmpi eq, %120, %c7_i32_52 : i32
    %147 = vector.extract_strided_slice %126 {offsets = [0, 0, 7], sizes = [4, 16, 16], strides = [1, 1, 1]} : vector<4x16x24xf32> to vector<4x16x16xf32>
    %148 = arith.select %146, %147, %145 : vector<4x16x16xf32>
    %c8_i32_53 = arith.constant 8 : i32
    %149 = arith.cmpi eq, %120, %c8_i32_53 : i32
    %150 = vector.extract_strided_slice %126 {offsets = [0, 0, 8], sizes = [4, 16, 16], strides = [1, 1, 1]} : vector<4x16x24xf32> to vector<4x16x16xf32>
    %151 = arith.select %149, %150, %148 : vector<4x16x16xf32>
    %152 = arith.index_cast %c3_i32_40 : i32 to index
    %c0_54 = arith.constant 0 : index
    %c0_55 = arith.constant 0 : index
    %c0_56 = arith.constant 0 : index
    %153 = vector.load %arg3[%152, %c0_54, %c0_55, %c0_56] : memref<4x4x16x16xf32, #tpu.memory_space<vmem>>, vector<1x4x16x16xf32>
    %154 = vector.shape_cast %153 : vector<1x4x16x16xf32> to vector<4x16x16xf32>
    %155 = vector.shape_cast %151 : vector<4x16x16xf32> to vector<1x4x16x16xf32>
    tpu.vector_store %arg3[%152, %c0_54, %c0_55, %c0_56], %155 {strides = array<i32>} : memref<4x4x16x16xf32, #tpu.memory_space<vmem>>, vector<1x4x16x16xf32>,
    %c4_i32_57 = arith.constant 4 : i32
    return
  }
  func.func @transform_0(%arg0: i32, %arg1: memref<8x2xi32, #tpu.memory_space<smem>>) -> (i32, i32, i32, i32) {
    %c0_i32 = arith.constant 0 : i32
    %c0_i32_0 = arith.constant 0 : i32
    %c0_i32_1 = arith.constant 0 : i32
    %c0_i32_2 = arith.constant 0 : i32
    return %arg0, %c0_i32, %c0_i32_0, %c0_i32_1 : i32, i32, i32, i32
  }
  func.func @transform_1(%arg0: i32, %arg1: memref<8x2xi32, #tpu.memory_space<smem>>) -> (i32, i32, i32, i32) {
    %c0_i32 = arith.constant 0 : i32
    %c0_i32_0 = arith.constant 0 : i32
    %c0_i32_1 = arith.constant 0 : i32
    %c0_i32_2 = arith.constant 0 : i32
    return %arg0, %c0_i32, %c0_i32_0, %c0_i32_1 : i32, i32, i32, i32
  }
}

</mosaic_0001>

<llo_original>
// kernel: tpu_custom_call.1
$region0: #{tpu_custom_call.1}
  #allocation0 [shape = 'u32[]', space=smem, size = 0x4, offset = 0x4, fixed_abs, tag = 'smem constant byte address 0x4 - core index']
  #allocation1 [shape = 'u32[144,128]{1,0:T(1,128)}', space=vmem, size = 0x12000, scoped, tag = 'internal scratch']
  #allocation2 [shape = 's32[1]{0}', space=sflag, size = 0x4, scoped, tag = 'scoped memory for tpu_custom_call.1']
  #allocation3 [shape = 'u8[4096]{0}', space=smem, size = 0x1000, scoped, tag = 'prefetched SMEM operand 0']
  %s0 = inlined_call_operand.vmem [shape: s32[8,2], index: 0, kind: input, shape index: {}]
  %s1 = inlined_call_operand.hbm [shape: f32[8,4,24,24], index: 1, kind: input, shape index: {}]
  %s2 = inlined_call_operand.hbm [shape: f32[8,4,16,16], index: 2, kind: output, shape index: {}]
  %s3 = sld [smem:[#allocation0]]
  $region41: #{tpu_custom_call.1} parent=0
    _
  %s5 = ssub.s32 1, %s3
  %s6 = scalar_select 0, %s5, %s3
  %s7 = sshll.u32 %s0, 4
  %s8 = int_to_ptr.vmem [resolvable:$true] %s7
  %10 = dma.vmem_to_smem %s8, 128, [#allocation3], [#allocation2]
  %11 = dma.done [#allocation2], 128
  %12 = sfence
  $region1: #{tpu_custom_call.1} parent=0
    #allocation4 [shape = 'u8[393216]{0}', space=vmem, size = 0x60000, scoped, tag = 'input window, operand 1']
    #allocation5 [shape = 's32[2]{0}', space=sflag, size = 0x8, scoped, tag = 'scoped memory for tpu_custom_call.1']
    #allocation6 [shape = 's32[2]{0}', space=sflag, size = 0x8, scoped, tag = 'scoped memory for tpu_custom_call.1']
    #allocation7 [shape = 'u8[262144]{0}', space=vmem, size = 0x40000, scoped, tag = 'output window, operand 0']
    %13 = vsyncpa [#allocation5], 0
    %s14 = scalar_lea.sflag [#allocation5], 1
    %15 = vsyncpa %s14, 0
    %16 = vsyncpa [#allocation6], 0
    %s17 = scalar_lea.sflag [#allocation6], 1
    %18 = vsyncpa %s17, 0
    loop: start=0, step=1, limit=4
    $region2: #{tpu_custom_call.1} parent=1 // loop_pre_header
      _
    $region3: #{tpu_custom_call.1} parent=1 // loop_header
      %s20 = sphi 0, %s24
      %p21 = scmp.ge.s32.totalorder %s20, 4
      %s30 = sphi 0, %s32
      %s33 = sphi 0, %s30
      %s34 = sphi 0, %s33
      %s50 = sphi 0, %s34
      %s56 = sphi 0, %s58
      %s59 = sphi 0, %s56
      %s60 = sphi 0, %s59
      %s76 = sphi 0, %s60
    $region4: #{tpu_custom_call.1} parent=1 // loop_header_branch
      %23 = sbr.rel (%p21) target = $region8
    $region5: #{tpu_custom_call.1} parent=1 // loop_body
      %s25 = ssub.s32 %s20, 1
      %s26 = ssub.s32 %s20, 2
      %s27 = sadd.s32 %s20, 1
      %s28 = ssub.s32 %s20, %s27
      %p29 = scmp.eq.s32.totalorder %s28, 0
      %s31 = sadd.s32 %s30, 1
      %s32 = scalar_select %p29, %s30, %s31
      %p35 = pneg %p29
      %p36 = scmp.eq.s32.totalorder %s20, 1
      %p37 = por %p35, %p36
      %p38 = scmp.ne.s32.totalorder %s30, %s33
      %p39 = scmp.eq.s32.totalorder %s20, 0
      %p40 = por %p38, %p39
      %p41 = scmp.ne.s32.totalorder %s30, %s33
      %p42 = scmp.eq.s32.totalorder %s25, 1
      %p43 = por %p41, %p42
      %p44 = scmp.ne.s32.totalorder %s33, %s34
      %p45 = scmp.eq.s32.totalorder %s25, 0
      %p46 = por %p44, %p45
      %p47 = scmp.ne.s32.totalorder %s33, %s34
      %p48 = scmp.eq.s32.totalorder %s26, 1
      %p49 = por %p47, %p48
      %p51 = scmp.ne.s32.totalorder %s34, %s50
      %p52 = scmp.eq.s32.totalorder %s26, 0
      %p53 = por %p51, %p52
      %s54 = ssub.s32 %s20, %s27
      %p55 = scmp.eq.s32.totalorder %s54, 0
      %s57 = sadd.s32 %s56, 1
      %s58 = scalar_select %p55, %s56, %s57
      %p61 = pneg %p55
      %p62 = scmp.eq.s32.totalorder %s20, 1
      %p63 = por %p61, %p62
      %p64 = scmp.ne.s32.totalorder %s56, %s59
      %p65 = scmp.eq.s32.totalorder %s20, 0
      %p66 = por %p64, %p65
      %p67 = scmp.ne.s32.totalorder %s56, %s59
      %p68 = scmp.eq.s32.totalorder %s25, 1
      %p69 = por %p67, %p68
      %p70 = scmp.ne.s32.totalorder %s59, %s60
      %p71 = scmp.eq.s32.totalorder %s25, 0
      %p72 = por %p70, %p71
      %p73 = scmp.ne.s32.totalorder %s59, %s60
      %p74 = scmp.eq.s32.totalorder %s26, 1
      %p75 = por %p73, %p74
      %p77 = scmp.ne.s32.totalorder %s60, %s76
      %p78 = scmp.eq.s32.totalorder %s26, 0
      %p79 = por %p77, %p78
      %p80 = scmp.le.s32.totalorder 1, %s20
      %p81 = scmp.lt.s32.totalorder %s20, 3
      %p82 = pnand %p80, %p81
      %p83 = pneg %p82
      // Predicated region
      $region9: #{tpu_custom_call.1} parent=5 // pred_check
        _
      $region10: #{tpu_custom_call.1} parent=5 // pred_check_branch
        %85 = sbr.rel (%p82) target = $region12
      $region11: #{tpu_custom_call.1} parent=5 // pred_region
        %s86 = ssub.s32 %s20, 1
      $region12: #{tpu_custom_call.1} parent=5 // pred_fallthru
        _
      %p87 = scmp.lt.s32.totalorder %s20, 2
      // Predicated region
      $region13: #{tpu_custom_call.1} parent=5 // pred_check
        %p88 = pneg %p87
      $region14: #{tpu_custom_call.1} parent=5 // pred_check_branch
        %90 = sbr.rel (%p88) target = $region16
      $region15: #{tpu_custom_call.1} parent=5 // pred_region
        // Predicated region
        $region17: #{tpu_custom_call.1} parent=15 // pred_check
          %p91 = pneg %p40
        $region18: #{tpu_custom_call.1} parent=15 // pred_check_branch
          %93 = sbr.rel (%p91) target = $region20
        $region19: #{tpu_custom_call.1} parent=15 // pred_region
          %s94 = sand.u32 %s30, 1
          %s95 = scalar_lea.sflag [#allocation5], %s94
          %s96 = sand.u32 %s30, 1
          %s97 = smul.addr %s96, 384
          %s98 = scalar_lea.vmem [#allocation4], %s97
          %s99 = smul.u32 4, %s20
          %s101 = ssub.s32 6144, 6144
          %102 = vsyncadd %s95, %s101
          %s103 = smul.addr %s99, 12
          %s104 = smul.addr %s103, 128
          %s105 = scalar_lea.hbm %s1, %s104
          %s106 = sshll.u32 %s98, 4
          %s107 = int_to_ptr.vmem [resolvable:$true] %s106
          %112 = dma.hbm_to_vmem [thread:$0]  %s105, 6144, %s107, %s95, 128, 128, 8
        $region20: #{tpu_custom_call.1} parent=15 // pred_fallthru
          _
      $region16: #{tpu_custom_call.1} parent=5 // pred_fallthru
        _
      %p113 = scmp.le.s32.totalorder 1, %s20
      %p114 = scmp.lt.s32.totalorder %s20, 3
      %p115 = pnand %p113, %p114
      %p116 = pneg %p115
      // Predicated region
      $region21: #{tpu_custom_call.1} parent=5 // pred_check
        _
      $region22: #{tpu_custom_call.1} parent=5 // pred_check_branch
        %118 = sbr.rel (%p115) target = $region24
      $region23: #{tpu_custom_call.1} parent=5 // pred_region
        %s119 = ssub.s32 %s20, 1
        %s120 = sand.u32 %s33, 1
        %s121 = scalar_lea.sflag [#allocation5], %s120
        %s122 = sand.u32 %s33, 1
        %s123 = smul.addr %s122, 384
        %s124 = scalar_lea.vmem [#allocation4], %s123
        // Predicated region
        $region25: #{tpu_custom_call.1} parent=23 // pred_check
          %p125 = pneg %p46
        $region26: #{tpu_custom_call.1} parent=23 // pred_check_branch
          %127 = sbr.rel (%p125) target = $region28
        $region27: #{tpu_custom_call.1} parent=23 // pred_region
          %128 = dma.done %s121, 6144
        $region28: #{tpu_custom_call.1} parent=23 // pred_fallthru
          _
        %s129 = sand.u32 %s33, 1
        %s130 = scalar_lea.sflag [#allocation5], %s129
        %s131 = sand.u32 %s33, 1
        %s132 = smul.addr %s131, 384
        %s133 = scalar_lea.vmem [#allocation4], %s132
        %p134 = pneg %p46
        %p135 = pneg %p43
        %p136 = pneg %p72
        %p137 = pneg %p69
        %s138 = sand.u32 %s59, 1
        %s139 = scalar_lea.sflag [#allocation6], %s138
        %s140 = sand.u32 %s59, 1
        %s141 = smul.addr %s140, 256
        %s142 = scalar_lea.vmem [#allocation7], %s141
        %s143 = smul.u32 4, %s25
        %s144 = smul.u32 4, %s25
        %s145 = smul.u32 %s25, 4
        %s146 = smul.u32 %s145, 128
        %s147 = sld [smem:[#allocation3 + %s146]]
        %s148 = sadd.s32 %s146, 1
        %s149 = sld [smem:[#allocation3 + %s148]]
        %s150 = scalar_lea.vmem %s124, %s149 [#allocation4]
        %v151 = vld [vmem:[%s150] sm:$0xff]
        %v152 = vld [vmem:[%s150 + $0x8] sm:$0xff]
        %v153 = vld [vmem:[%s150 + $0x18] sm:$0xff]
        %v154 = vld [vmem:[%s150 + $0x20] sm:$0xff]
        %v155 = vld [vmem:[%s150 + $0x30] sm:$0xff]
        %v156 = vld [vmem:[%s150 + $0x38] sm:$0xff]
        %v157 = vld [vmem:[%s150 + $0x48] sm:$0xff]
        %v158 = vld [vmem:[%s150 + $0x50] sm:$0xff]
        %p159 = scmp.eq.s32.totalorder %s147, 1
        %s160 = scalar_select %p159, 1, 0
        %v161 = vstv %s160
        %vm162 = vcmp.eq.s32.totalorder %v161, 1
        %171 = vrot.lane.b32.xlu0 %v151, 1
        %v172 = vpop.permute.xlu0 %171
        %173 = vrot.lane.b32.xlu0 %v152, 1
        %v174 = vpop.permute.xlu0 %173
        %175 = vrot.lane.b32.xlu0 %v153, 1
        %v176 = vpop.permute.xlu0 %175
        %177 = vrot.lane.b32.xlu0 %v154, 1
        %v178 = vpop.permute.xlu0 %177
        %179 = vrot.lane.b32.xlu0 %v155, 1
        %v180 = vpop.permute.xlu0 %179
        %181 = vrot.lane.b32.xlu0 %v156, 1
        %v182 = vpop.permute.xlu0 %181
        %183 = vrot.lane.b32.xlu0 %v157, 1
        %v184 = vpop.permute.xlu0 %183
        %185 = vrot.lane.b32.xlu0 %v158, 1
        %v186 = vpop.permute.xlu0 %185
        %v195 = vsel %vm162, %v151, %v172
        %v196 = vsel %vm162, %v152, %v174
        %v197 = vsel %vm162, %v153, %v176
        %v198 = vsel %vm162, %v154, %v178
        %v199 = vsel %vm162, %v155, %v180
        %v200 = vsel %vm162, %v156, %v182
        %v201 = vsel %vm162, %v157, %v184
        %v202 = vsel %vm162, %v158, %v186
        %p203 = scmp.eq.s32.totalorder %s147, 2
        %s204 = scalar_select %p203, 1, 0
        %v205 = vstv %s204
        %vm206 = vcmp.eq.s32.totalorder %v205, 1
        %215 = vrot.lane.b32.xlu0 %v195, 1
        %v216 = vpop.permute.xlu0 %215
        %217 = vrot.lane.b32.xlu0 %v196, 1
        %v218 = vpop.permute.xlu0 %217
        %219 = vrot.lane.b32.xlu0 %v197, 1
        %v220 = vpop.permute.xlu0 %219
        %221 = vrot.lane.b32.xlu0 %v198, 1
        %v222 = vpop.permute.xlu0 %221
        %223 = vrot.lane.b32.xlu0 %v199, 1
        %v224 = vpop.permute.xlu0 %223
        %225 = vrot.lane.b32.xlu0 %v200, 1
        %v226 = vpop.permute.xlu0 %225
        %227 = vrot.lane.b32.xlu0 %v201, 1
        %v228 = vpop.permute.xlu0 %227
        %229 = vrot.lane.b32.xlu0 %v202, 1
        %v230 = vpop.permute.xlu0 %229
        %v239 = vsel %vm206, %v151, %v216
        %v240 = vsel %vm206, %v152, %v218
        %v241 = vsel %vm206, %v153, %v220
        %v242 = vsel %vm206, %v154, %v222
        %v243 = vsel %vm206, %v155, %v224
        %v244 = vsel %vm206, %v156, %v226
        %v245 = vsel %vm206, %v157, %v228
        %v246 = vsel %vm206, %v158, %v230
        %p247 = scmp.eq.s32.totalorder %s147, 3
        %s248 = scalar_select %p247, 1, 0
        %v249 = vstv %s248
        %vm250 = vcmp.eq.s32.totalorder %v249, 1
        %259 = vrot.lane.b32.xlu0 %v239, 1
        %v260 = vpop.permute.xlu0 %259
        %261 = vrot.lane.b32.xlu0 %v240, 1
        %v262 = vpop.permute.xlu0 %261
        %263 = vrot.lane.b32.xlu0 %v241, 1
        %v264 = vpop.permute.xlu0 %263
        %265 = vrot.lane.b32.xlu0 %v242, 1
        %v266 = vpop.permute.xlu0 %265
        %267 = vrot.lane.b32.xlu0 %v243, 1
        %v268 = vpop.permute.xlu0 %267
        %269 = vrot.lane.b32.xlu0 %v244, 1
        %v270 = vpop.permute.xlu0 %269
        %271 = vrot.lane.b32.xlu0 %v245, 1
        %v272 = vpop.permute.xlu0 %271
        %273 = vrot.lane.b32.xlu0 %v246, 1
        %v274 = vpop.permute.xlu0 %273
        %v283 = vsel %vm250, %v151, %v260
        %v284 = vsel %vm250, %v152, %v262
        %v285 = vsel %vm250, %v153, %v264
        %v286 = vsel %vm250, %v154, %v266
        %v287 = vsel %vm250, %v155, %v268
        %v288 = vsel %vm250, %v156, %v270
        %v289 = vsel %vm250, %v157, %v272
        %v290 = vsel %vm250, %v158, %v274
        %p291 = scmp.eq.s32.totalorder %s147, 4
        %s292 = scalar_select %p291, 1, 0
        %v293 = vstv %s292
        %vm294 = vcmp.eq.s32.totalorder %v293, 1
        %303 = vrot.lane.b32.xlu0 %v283, 1
        %v304 = vpop.permute.xlu0 %303
        %305 = vrot.lane.b32.xlu0 %v284, 1
        %v306 = vpop.permute.xlu0 %305
        %307 = vrot.lane.b32.xlu0 %v285, 1
        %v308 = vpop.permute.xlu0 %307
        %309 = vrot.lane.b32.xlu0 %v286, 1
        %v310 = vpop.permute.xlu0 %309
        %311 = vrot.lane.b32.xlu0 %v287, 1
        %v312 = vpop.permute.xlu0 %311
        %313 = vrot.lane.b32.xlu0 %v288, 1
        %v314 = vpop.permute.xlu0 %313
        %315 = vrot.lane.b32.xlu0 %v289, 1
        %v316 = vpop.permute.xlu0 %315
        %317 = vrot.lane.b32.xlu0 %v290, 1
        %v318 = vpop.permute.xlu0 %317
        %v327 = vsel %vm294, %v151, %v304
        %v328 = vsel %vm294, %v152, %v306
        %v329 = vsel %vm294, %v153, %v308
        %v330 = vsel %vm294, %v154, %v310
        %v331 = vsel %vm294, %v155, %v312
        %v332 = vsel %vm294, %v156, %v314
        %v333 = vsel %vm294, %v157, %v316
        %v334 = vsel %vm294, %v158, %v318
        %p335 = scmp.eq.s32.totalorder %s147, 5
        %s336 = scalar_select %p335, 1, 0
        %v337 = vstv %s336
        %vm338 = vcmp.eq.s32.totalorder %v337, 1
        %347 = vrot.lane.b32.xlu0 %v327, 1
        %v348 = vpop.permute.xlu0 %347
        %349 = vrot.lane.b32.xlu0 %v328, 1
        %v350 = vpop.permute.xlu0 %349
        %351 = vrot.lane.b32.xlu0 %v329, 1
        %v352 = vpop.permute.xlu0 %351
        %353 = vrot.lane.b32.xlu0 %v330, 1
        %v354 = vpop.permute.xlu0 %353
        %355 = vrot.lane.b32.xlu0 %v331, 1
        %v356 = vpop.permute.xlu0 %355
        %357 = vrot.lane.b32.xlu0 %v332, 1
        %v358 = vpop.permute.xlu0 %357
        %359 = vrot.lane.b32.xlu0 %v333, 1
        %v360 = vpop.permute.xlu0 %359
        %361 = vrot.lane.b32.xlu0 %v334, 1
        %v362 = vpop.permute.xlu0 %361
        %v371 = vsel %vm338, %v151, %v348
        %v372 = vsel %vm338, %v152, %v350
        %v373 = vsel %vm338, %v153, %v352
        %v374 = vsel %vm338, %v154, %v354
        %v375 = vsel %vm338, %v155, %v356
        %v376 = vsel %vm338, %v156, %v358
        %v377 = vsel %vm338, %v157, %v360
        %v378 = vsel %vm338, %v158, %v362
        %p379 = scmp.eq.s32.totalorder %s147, 6
        %s380 = scalar_select %p379, 1, 0
        %v381 = vstv %s380
        %vm382 = vcmp.eq.s32.totalorder %v381, 1
        %391 = vrot.lane.b32.xlu0 %v371, 1
        %v392 = vpop.permute.xlu0 %391
        %393 = vrot.lane.b32.xlu0 %v372, 1
        %v394 = vpop.permute.xlu0 %393
        %395 = vrot.lane.b32.xlu0 %v373, 1
        %v396 = vpop.permute.xlu0 %395
        %397 = vrot.lane.b32.xlu0 %v374, 1
        %v398 = vpop.permute.xlu0 %397
        %399 = vrot.lane.b32.xlu0 %v375, 1
        %v400 = vpop.permute.xlu0 %399
        %401 = vrot.lane.b32.xlu0 %v376, 1
        %v402 = vpop.permute.xlu0 %401
        %403 = vrot.lane.b32.xlu0 %v377, 1
        %v404 = vpop.permute.xlu0 %403
        %405 = vrot.lane.b32.xlu0 %v378, 1
        %v406 = vpop.permute.xlu0 %405
        %v415 = vsel %vm382, %v151, %v392
        %v416 = vsel %vm382, %v152, %v394
        %v417 = vsel %vm382, %v153, %v396
        %v418 = vsel %vm382, %v154, %v398
        %v419 = vsel %vm382, %v155, %v400
        %v420 = vsel %vm382, %v156, %v402
        %v421 = vsel %vm382, %v157, %v404
        %v422 = vsel %vm382, %v158, %v406
        %p423 = scmp.eq.s32.totalorder %s147, 7
        %s424 = scalar_select %p423, 1, 0
        %v425 = vstv %s424
        %vm426 = vcmp.eq.s32.totalorder %v425, 1
        %435 = vrot.lane.b32.xlu0 %v415, 1
        %v436 = vpop.permute.xlu0 %435
        %437 = vrot.lane.b32.xlu0 %v416, 1
        %v438 = vpop.permute.xlu0 %437
        %439 = vrot.lane.b32.xlu0 %v417, 1
        %v440 = vpop.permute.xlu0 %439
        %441 = vrot.lane.b32.xlu0 %v418, 1
        %v442 = vpop.permute.xlu0 %441
        %443 = vrot.lane.b32.xlu0 %v419, 1
        %v444 = vpop.permute.xlu0 %443
        %445 = vrot.lane.b32.xlu0 %v420, 1
        %v446 = vpop.permute.xlu0 %445
        %447 = vrot.lane.b32.xlu0 %v421, 1
        %v448 = vpop.permute.xlu0 %447
        %449 = vrot.lane.b32.xlu0 %v422, 1
        %v450 = vpop.permute.xlu0 %449
        %v459 = vsel %vm426, %v151, %v436
        %v460 = vsel %vm426, %v152, %v438
        %v461 = vsel %vm426, %v153, %v440
        %v462 = vsel %vm426, %v154, %v442
        %v463 = vsel %vm426, %v155, %v444
        %v464 = vsel %vm426, %v156, %v446
        %v465 = vsel %vm426, %v157, %v448
        %v466 = vsel %vm426, %v158, %v450
        %p467 = scmp.eq.s32.totalorder %s147, 8
        %s468 = scalar_select %p467, 1, 0
        %v469 = vstv %s468
        %vm470 = vcmp.eq.s32.totalorder %v469, 1
        %479 = vrot.lane.b32.xlu0 %v459, 1
        %v480 = vpop.permute.xlu0 %479
        %481 = vrot.lane.b32.xlu0 %v460, 1
        %v482 = vpop.permute.xlu0 %481
        %483 = vrot.lane.b32.xlu0 %v461, 1
        %v484 = vpop.permute.xlu0 %483
        %485 = vrot.lane.b32.xlu0 %v462, 1
        %v486 = vpop.permute.xlu0 %485
        %487 = vrot.lane.b32.xlu0 %v463, 1
        %v488 = vpop.permute.xlu0 %487
        %489 = vrot.lane.b32.xlu0 %v464, 1
        %v490 = vpop.permute.xlu0 %489
        %491 = vrot.lane.b32.xlu0 %v465, 1
        %v492 = vpop.permute.xlu0 %491
        %493 = vrot.lane.b32.xlu0 %v466, 1
        %v494 = vpop.permute.xlu0 %493
        %v503 = vsel %vm470, %v151, %v480
        %v504 = vsel %vm470, %v152, %v482
        %v505 = vsel %vm470, %v153, %v484
        %v506 = vsel %vm470, %v154, %v486
        %v507 = vsel %vm470, %v155, %v488
        %v508 = vsel %vm470, %v156, %v490
        %v509 = vsel %vm470, %v157, %v492
        %v510 = vsel %vm470, %v158, %v494
        %519 = vrot.lane.b32.xlu0 %v503, 120
        %v520 = vpop.permute.xlu0 %519
        %521 = vrot.lane.b32.xlu0 %v504, 120
        %v522 = vpop.permute.xlu0 %521
        %523 = vrot.lane.b32.xlu0 %v505, 120
        %v524 = vpop.permute.xlu0 %523
        %525 = vrot.lane.b32.xlu0 %v506, 120
        %v526 = vpop.permute.xlu0 %525
        %527 = vrot.lane.b32.xlu0 %v507, 120
        %v528 = vpop.permute.xlu0 %527
        %529 = vrot.lane.b32.xlu0 %v508, 120
        %v530 = vpop.permute.xlu0 %529
        %531 = vrot.lane.b32.xlu0 %v509, 120
        %v532 = vpop.permute.xlu0 %531
        %533 = vrot.lane.b32.xlu0 %v510, 120
        %v534 = vpop.permute.xlu0 %533
        %vm543 = vcmask 130048
        %544 = vst.msk [vmem:[%s142] sm:$0xff] %vm543, %v520
        %545 = vst.msk [vmem:[%s142 + $0x8] sm:$0xff] %vm543, %v522
        %546 = vst.msk [vmem:[%s142 + $0x10] sm:$0xff] %vm543, %v524
        %547 = vst.msk [vmem:[%s142 + $0x18] sm:$0xff] %vm543, %v526
        %548 = vst.msk [vmem:[%s142 + $0x20] sm:$0xff] %vm543, %v528
        %549 = vst.msk [vmem:[%s142 + $0x28] sm:$0xff] %vm543, %v530
        %550 = vst.msk [vmem:[%s142 + $0x30] sm:$0xff] %vm543, %v532
        %551 = vst.msk [vmem:[%s142 + $0x38] sm:$0xff] %vm543, %v534
        %s552 = sadd.s32 %s145, 1
        %s553 = smul.u32 %s552, 128
        %s554 = sld [smem:[#allocation3 + %s553]]
        %s555 = sadd.s32 %s553, 1
        %s556 = sld [smem:[#allocation3 + %s555]]
        %s557 = sadd.s32 %s556, 96
        %s558 = scalar_lea.vmem %s124, %s557 [#allocation4]
        %v559 = vld [vmem:[%s558] sm:$0xff]
        %v560 = vld [vmem:[%s558 + $0x8] sm:$0xff]
        %v561 = vld [vmem:[%s558 + $0x18] sm:$0xff]
        %v562 = vld [vmem:[%s558 + $0x20] sm:$0xff]
        %v563 = vld [vmem:[%s558 + $0x30] sm:$0xff]
        %v564 = vld [vmem:[%s558 + $0x38] sm:$0xff]
        %v565 = vld [vmem:[%s558 + $0x48] sm:$0xff]
        %v566 = vld [vmem:[%s558 + $0x50] sm:$0xff]
        %p567 = scmp.eq.s32.totalorder %s554, 1
        %s568 = scalar_select %p567, 1, 0
        %v569 = vstv %s568
        %vm570 = vcmp.eq.s32.totalorder %v569, 1
        %579 = vrot.lane.b32.xlu0 %v559, 1
        %v580 = vpop.permute.xlu0 %579
        %581 = vrot.lane.b32.xlu0 %v560, 1
        %v582 = vpop.permute.xlu0 %581
        %583 = vrot.lane.b32.xlu0 %v561, 1
        %v584 = vpop.permute.xlu0 %583
        %585 = vrot.lane.b32.xlu0 %v562, 1
        %v586 = vpop.permute.xlu0 %585
        %587 = vrot.lane.b32.xlu0 %v563, 1
        %v588 = vpop.permute.xlu0 %587
        %589 = vrot.lane.b32.xlu0 %v564, 1
        %v590 = vpop.permute.xlu0 %589
        %591 = vrot.lane.b32.xlu0 %v565, 1
        %v592 = vpop.permute.xlu0 %591
        %593 = vrot.lane.b32.xlu0 %v566, 1
        %v594 = vpop.permute.xlu0 %593
        %v603 = vsel %vm570, %v559, %v580
        %v604 = vsel %vm570, %v560, %v582
        %v605 = vsel %vm570, %v561, %v584
        %v606 = vsel %vm570, %v562, %v586
        %v607 = vsel %vm570, %v563, %v588
        %v608 = vsel %vm570, %v564, %v590
        %v609 = vsel %vm570, %v565, %v592
        %v610 = vsel %vm570, %v566, %v594
        %p611 = scmp.eq.s32.totalorder %s554, 2
        %s612 = scalar_select %p611, 1, 0
        %v613 = vstv %s612
        %vm614 = vcmp.eq.s32.totalorder %v613, 1
        %623 = vrot.lane.b32.xlu0 %v603, 1
        %v624 = vpop.permute.xlu0 %623
        %625 = vrot.lane.b32.xlu0 %v604, 1
        %v626 = vpop.permute.xlu0 %625
        %627 = vrot.lane.b32.xlu0 %v605, 1
        %v628 = vpop.permute.xlu0 %627
        %629 = vrot.lane.b32.xlu0 %v606, 1
        %v630 = vpop.permute.xlu0 %629
        %631 = vrot.lane.b32.xlu0 %v607, 1
        %v632 = vpop.permute.xlu0 %631
        %633 = vrot.lane.b32.xlu0 %v608, 1
        %v634 = vpop.permute.xlu0 %633
        %635 = vrot.lane.b32.xlu0 %v609, 1
        %v636 = vpop.permute.xlu0 %635
        %637 = vrot.lane.b32.xlu0 %v610, 1
        %v638 = vpop.permute.xlu0 %637
        %v647 = vsel %vm614, %v559, %v624
        %v648 = vsel %vm614, %v560, %v626
        %v649 = vsel %vm614, %v561, %v628
        %v650 = vsel %vm614, %v562, %v630
        %v651 = vsel %vm614, %v563, %v632
        %v652 = vsel %vm614, %v564, %v634
        %v653 = vsel %vm614, %v565, %v636
        %v654 = vsel %vm614, %v566, %v638
        %p655 = scmp.eq.s32.totalorder %s554, 3
        %s656 = scalar_select %p655, 1, 0
        %v657 = vstv %s656
        %vm658 = vcmp.eq.s32.totalorder %v657, 1
        %667 = vrot.lane.b32.xlu0 %v647, 1
        %v668 = vpop.permute.xlu0 %667
        %669 = vrot.lane.b32.xlu0 %v648, 1
        %v670 = vpop.permute.xlu0 %669
        %671 = vrot.lane.b32.xlu0 %v649, 1
        %v672 = vpop.permute.xlu0 %671
        %673 = vrot.lane.b32.xlu0 %v650, 1
        %v674 = vpop.permute.xlu0 %673
        %675 = vrot.lane.b32.xlu0 %v651, 1
        %v676 = vpop.permute.xlu0 %675
        %677 = vrot.lane.b32.xlu0 %v652, 1
        %v678 = vpop.permute.xlu0 %677
        %679 = vrot.lane.b32.xlu0 %v653, 1
        %v680 = vpop.permute.xlu0 %679
        %681 = vrot.lane.b32.xlu0 %v654, 1
        %v682 = vpop.permute.xlu0 %681
        %v691 = vsel %vm658, %v559, %v668
        %v692 = vsel %vm658, %v560, %v670
        %v693 = vsel %vm658, %v561, %v672
        %v694 = vsel %vm658, %v562, %v674
        %v695 = vsel %vm658, %v563, %v676
        %v696 = vsel %vm658, %v564, %v678
        %v697 = vsel %vm658, %v565, %v680
        %v698 = vsel %vm658, %v566, %v682
        %p699 = scmp.eq.s32.totalorder %s554, 4
        %s700 = scalar_select %p699, 1, 0
        %v701 = vstv %s700
        %vm702 = vcmp.eq.s32.totalorder %v701, 1
        %711 = vrot.lane.b32.xlu0 %v691, 1
        %v712 = vpop.permute.xlu0 %711
        %713 = vrot.lane.b32.xlu0 %v692, 1
        %v714 = vpop.permute.xlu0 %713
        %715 = vrot.lane.b32.xlu0 %v693, 1
        %v716 = vpop.permute.xlu0 %715
        %717 = vrot.lane.b32.xlu0 %v694, 1
        %v718 = vpop.permute.xlu0 %717
        %719 = vrot.lane.b32.xlu0 %v695, 1
        %v720 = vpop.permute.xlu0 %719
        %721 = vrot.lane.b32.xlu0 %v696, 1
        %v722 = vpop.permute.xlu0 %721
        %723 = vrot.lane.b32.xlu0 %v697, 1
        %v724 = vpop.permute.xlu0 %723
        %725 = vrot.lane.b32.xlu0 %v698, 1
        %v726 = vpop.permute.xlu0 %725
        %v735 = vsel %vm702, %v559, %v712
        %v736 = vsel %vm702, %v560, %v714
        %v737 = vsel %vm702, %v561, %v716
        %v738 = vsel %vm702, %v562, %v718
        %v739 = vsel %vm702, %v563, %v720
        %v740 = vsel %vm702, %v564, %v722
        %v741 = vsel %vm702, %v565, %v724
        %v742 = vsel %vm702, %v566, %v726
        %p743 = scmp.eq.s32.totalorder %s554, 5
        %s744 = scalar_select %p743, 1, 0
        %v745 = vstv %s744
        %vm746 = vcmp.eq.s32.totalorder %v745, 1
        %755 = vrot.lane.b32.xlu0 %v735, 1
        %v756 = vpop.permute.xlu0 %755
        %757 = vrot.lane.b32.xlu0 %v736, 1
        %v758 = vpop.permute.xlu0 %757
        %759 = vrot.lane.b32.xlu0 %v737, 1
        %v760 = vpop.permute.xlu0 %759
        %761 = vrot.lane.b32.xlu0 %v738, 1
        %v762 = vpop.permute.xlu0 %761
        %763 = vrot.lane.b32.xlu0 %v739, 1
        %v764 = vpop.permute.xlu0 %763
        %765 = vrot.lane.b32.xlu0 %v740, 1
        %v766 = vpop.permute.xlu0 %765
        %767 = vrot.lane.b32.xlu0 %v741, 1
        %v768 = vpop.permute.xlu0 %767
        %769 = vrot.lane.b32.xlu0 %v742, 1
        %v770 = vpop.permute.xlu0 %769
        %v779 = vsel %vm746, %v559, %v756
        %v780 = vsel %vm746, %v560, %v758
        %v781 = vsel %vm746, %v561, %v760
        %v782 = vsel %vm746, %v562, %v762
        %v783 = vsel %vm746, %v563, %v764
        %v784 = vsel %vm746, %v564, %v766
        %v785 = vsel %vm746, %v565, %v768
        %v786 = vsel %vm746, %v566, %v770
        %p787 = scmp.eq.s32.totalorder %s554, 6
        %s788 = scalar_select %p787, 1, 0
        %v789 = vstv %s788
        %vm790 = vcmp.eq.s32.totalorder %v789, 1
        %799 = vrot.lane.b32.xlu0 %v779, 1
        %v800 = vpop.permute.xlu0 %799
        %801 = vrot.lane.b32.xlu0 %v780, 1
        %v802 = vpop.permute.xlu0 %801
        %803 = vrot.lane.b32.xlu0 %v781, 1
        %v804 = vpop.permute.xlu0 %803
        %805 = vrot.lane.b32.xlu0 %v782, 1
        %v806 = vpop.permute.xlu0 %805
        %807 = vrot.lane.b32.xlu0 %v783, 1
        %v808 = vpop.permute.xlu0 %807
        %809 = vrot.lane.b32.xlu0 %v784, 1
        %v810 = vpop.permute.xlu0 %809
        %811 = vrot.lane.b32.xlu0 %v785, 1
        %v812 = vpop.permute.xlu0 %811
        %813 = vrot.lane.b32.xlu0 %v786, 1
        %v814 = vpop.permute.xlu0 %813
        %v823 = vsel %vm790, %v559, %v800
        %v824 = vsel %vm790, %v560, %v802
        %v825 = vsel %vm790, %v561, %v804
        %v826 = vsel %vm790, %v562, %v806
        %v827 = vsel %vm790, %v563, %v808
        %v828 = vsel %vm790, %v564, %v810
        %v829 = vsel %vm790, %v565, %v812
        %v830 = vsel %vm790, %v566, %v814
        %p831 = scmp.eq.s32.totalorder %s554, 7
        %s832 = scalar_select %p831, 1, 0
        %v833 = vstv %s832
        %vm834 = vcmp.eq.s32.totalorder %v833, 1
        %843 = vrot.lane.b32.xlu0 %v823, 1
        %v844 = vpop.permute.xlu0 %843
        %845 = vrot.lane.b32.xlu0 %v824, 1
        %v846 = vpop.permute.xlu0 %845
        %847 = vrot.lane.b32.xlu0 %v825, 1
        %v848 = vpop.permute.xlu0 %847
        %849 = vrot.lane.b32.xlu0 %v826, 1
        %v850 = vpop.permute.xlu0 %849
        %851 = vrot.lane.b32.xlu0 %v827, 1
        %v852 = vpop.permute.xlu0 %851
        %853 = vrot.lane.b32.xlu0 %v828, 1
        %v854 = vpop.permute.xlu0 %853
        %855 = vrot.lane.b32.xlu0 %v829, 1
        %v856 = vpop.permute.xlu0 %855
        %857 = vrot.lane.b32.xlu0 %v830, 1
        %v858 = vpop.permute.xlu0 %857
        %v867 = vsel %vm834, %v559, %v844
        %v868 = vsel %vm834, %v560, %v846
        %v869 = vsel %vm834, %v561, %v848
        %v870 = vsel %vm834, %v562, %v850
        %v871 = vsel %vm834, %v563, %v852
        %v872 = vsel %vm834, %v564, %v854
        %v873 = vsel %vm834, %v565, %v856
        %v874 = vsel %vm834, %v566, %v858
        %p875 = scmp.eq.s32.totalorder %s554, 8
        %s876 = scalar_select %p875, 1, 0
        %v877 = vstv %s876
        %vm878 = vcmp.eq.s32.totalorder %v877, 1
        %887 = vrot.lane.b32.xlu0 %v867, 1
        %v888 = vpop.permute.xlu0 %887
        %889 = vrot.lane.b32.xlu0 %v868, 1
        %v890 = vpop.permute.xlu0 %889
        %891 = vrot.lane.b32.xlu0 %v869, 1
        %v892 = vpop.permute.xlu0 %891
        %893 = vrot.lane.b32.xlu0 %v870, 1
        %v894 = vpop.permute.xlu0 %893
        %895 = vrot.lane.b32.xlu0 %v871, 1
        %v896 = vpop.permute.xlu0 %895
        %897 = vrot.lane.b32.xlu0 %v872, 1
        %v898 = vpop.permute.xlu0 %897
        %899 = vrot.lane.b32.xlu0 %v873, 1
        %v900 = vpop.permute.xlu0 %899
        %901 = vrot.lane.b32.xlu0 %v874, 1
        %v902 = vpop.permute.xlu0 %901
        %v911 = vsel %vm878, %v559, %v888
        %v912 = vsel %vm878, %v560, %v890
        %v913 = vsel %vm878, %v561, %v892
        %v914 = vsel %vm878, %v562, %v894
        %v915 = vsel %vm878, %v563, %v896
        %v916 = vsel %vm878, %v564, %v898
        %v917 = vsel %vm878, %v565, %v900
        %v918 = vsel %vm878, %v566, %v902
        %927 = vrot.lane.b32.xlu0 %v911, 120
        %v928 = vpop.permute.xlu0 %927
        %929 = vrot.lane.b32.xlu0 %v912, 120
        %v930 = vpop.permute.xlu0 %929
        %931 = vrot.lane.b32.xlu0 %v913, 120
        %v932 = vpop.permute.xlu0 %931
        %933 = vrot.lane.b32.xlu0 %v914, 120
        %v934 = vpop.permute.xlu0 %933
        %935 = vrot.lane.b32.xlu0 %v915, 120
        %v936 = vpop.permute.xlu0 %935
        %937 = vrot.lane.b32.xlu0 %v916, 120
        %v938 = vpop.permute.xlu0 %937
        %939 = vrot.lane.b32.xlu0 %v917, 120
        %v940 = vpop.permute.xlu0 %939
        %941 = vrot.lane.b32.xlu0 %v918, 120
        %v942 = vpop.permute.xlu0 %941
        %s951 = scalar_lea.vmem %s142, 64 [#allocation7]
        %952 = vst.msk [vmem:[%s951] sm:$0xff] %vm543, %v928
        %953 = vst.msk [vmem:[%s951 + $0x8] sm:$0xff] %vm543, %v930
        %954 = vst.msk [vmem:[%s951 + $0x10] sm:$0xff] %vm543, %v932
        %955 = vst.msk [vmem:[%s951 + $0x18] sm:$0xff] %vm543, %v934
        %956 = vst.msk [vmem:[%s951 + $0x20] sm:$0xff] %vm543, %v936
        %957 = vst.msk [vmem:[%s951 + $0x28] sm:$0xff] %vm543, %v938
        %958 = vst.msk [vmem:[%s951 + $0x30] sm:$0xff] %vm543, %v940
        %959 = vst.msk [vmem:[%s951 + $0x38] sm:$0xff] %vm543, %v942
        %s960 = sadd.s32 %s145, 2
        %s961 = smul.u32 %s960, 128
        %s962 = sld [smem:[#allocation3 + %s961]]
        %s963 = sadd.s32 %s961, 1
        %s964 = sld [smem:[#allocation3 + %s963]]
        %s965 = sadd.s32 %s964, 192
        %s966 = scalar_lea.vmem %s124, %s965 [#allocation4]
        %v967 = vld [vmem:[%s966] sm:$0xff]
        %v968 = vld [vmem:[%s966 + $0x8] sm:$0xff]
        %v969 = vld [vmem:[%s966 + $0x18] sm:$0xff]
        %v970 = vld [vmem:[%s966 + $0x20] sm:$0xff]
        %v971 = vld [vmem:[%s966 + $0x30] sm:$0xff]
        %v972 = vld [vmem:[%s966 + $0x38] sm:$0xff]
        %v973 = vld [vmem:[%s966 + $0x48] sm:$0xff]
        %v974 = vld [vmem:[%s966 + $0x50] sm:$0xff]
        %p975 = scmp.eq.s32.totalorder %s962, 1
        %s976 = scalar_select %p975, 1, 0
        %v977 = vstv %s976
        %vm978 = vcmp.eq.s32.totalorder %v977, 1
        %987 = vrot.lane.b32.xlu0 %v967, 1
        %v988 = vpop.permute.xlu0 %987
        %989 = vrot.lane.b32.xlu0 %v968, 1
        %v990 = vpop.permute.xlu0 %989
        %991 = vrot.lane.b32.xlu0 %v969, 1
        %v992 = vpop.permute.xlu0 %991
        %993 = vrot.lane.b32.xlu0 %v970, 1
        %v994 = vpop.permute.xlu0 %993
        %995 = vrot.lane.b32.xlu0 %v971, 1
        %v996 = vpop.permute.xlu0 %995
        %997 = vrot.lane.b32.xlu0 %v972, 1
        %v998 = vpop.permute.xlu0 %997
        %999 = vrot.lane.b32.xlu0 %v973, 1
        %v1000 = vpop.permute.xlu0 %999
        %1001 = vrot.lane.b32.xlu0 %v974, 1
        %v1002 = vpop.permute.xlu0 %1001
        %v1011 = vsel %vm978, %v967, %v988
        %v1012 = vsel %vm978, %v968, %v990
        %v1013 = vsel %vm978, %v969, %v992
        %v1014 = vsel %vm978, %v970, %v994
        %v1015 = vsel %vm978, %v971, %v996
        %v1016 = vsel %vm978, %v972, %v998
        %v1017 = vsel %vm978, %v973, %v1000
        %v1018 = vsel %vm978, %v974, %v1002
        %p1019 = scmp.eq.s32.totalorder %s962, 2
        %s1020 = scalar_select %p1019, 1, 0
        %v1021 = vstv %s1020
        %vm1022 = vcmp.eq.s32.totalorder %v1021, 1
        %1031 = vrot.lane.b32.xlu0 %v1011, 1
        %v1032 = vpop.permute.xlu0 %1031
        %1033 = vrot.lane.b32.xlu0 %v1012, 1
        %v1034 = vpop.permute.xlu0 %1033
        %1035 = vrot.lane.b32.xlu0 %v1013, 1
        %v1036 = vpop.permute.xlu0 %1035
        %1037 = vrot.lane.b32.xlu0 %v1014, 1
        %v1038 = vpop.permute.xlu0 %1037
        %1039 = vrot.lane.b32.xlu0 %v1015, 1
        %v1040 = vpop.permute.xlu0 %1039
        %1041 = vrot.lane.b32.xlu0 %v1016, 1
        %v1042 = vpop.permute.xlu0 %1041
        %1043 = vrot.lane.b32.xlu0 %v1017, 1
        %v1044 = vpop.permute.xlu0 %1043
        %1045 = vrot.lane.b32.xlu0 %v1018, 1
        %v1046 = vpop.permute.xlu0 %1045
        %v1055 = vsel %vm1022, %v967, %v1032
        %v1056 = vsel %vm1022, %v968, %v1034
        %v1057 = vsel %vm1022, %v969, %v1036
        %v1058 = vsel %vm1022, %v970, %v1038
        %v1059 = vsel %vm1022, %v971, %v1040
        %v1060 = vsel %vm1022, %v972, %v1042
        %v1061 = vsel %vm1022, %v973, %v1044
        %v1062 = vsel %vm1022, %v974, %v1046
        %p1063 = scmp.eq.s32.totalorder %s962, 3
        %s1064 = scalar_select %p1063, 1, 0
        %v1065 = vstv %s1064
        %vm1066 = vcmp.eq.s32.totalorder %v1065, 1
        %1075 = vrot.lane.b32.xlu0 %v1055, 1
        %v1076 = vpop.permute.xlu0 %1075
        %1077 = vrot.lane.b32.xlu0 %v1056, 1
        %v1078 = vpop.permute.xlu0 %1077
        %1079 = vrot.lane.b32.xlu0 %v1057, 1
        %v1080 = vpop.permute.xlu0 %1079
        %1081 = vrot.lane.b32.xlu0 %v1058, 1
        %v1082 = vpop.permute.xlu0 %1081
        %1083 = vrot.lane.b32.xlu0 %v1059, 1
        %v1084 = vpop.permute.xlu0 %1083
        %1085 = vrot.lane.b32.xlu0 %v1060, 1
        %v1086 = vpop.permute.xlu0 %1085
        %1087 = vrot.lane.b32.xlu0 %v1061, 1
        %v1088 = vpop.permute.xlu0 %1087
        %1089 = vrot.lane.b32.xlu0 %v1062, 1
        %v1090 = vpop.permute.xlu0 %1089
        %v1099 = vsel %vm1066, %v967, %v1076
        %v1100 = vsel %vm1066, %v968, %v1078
        %v1101 = vsel %vm1066, %v969, %v1080
        %v1102 = vsel %vm1066, %v970, %v1082
        %v1103 = vsel %vm1066, %v971, %v1084
        %v1104 = vsel %vm1066, %v972, %v1086
        %v1105 = vsel %vm1066, %v973, %v1088
        %v1106 = vsel %vm1066, %v974, %v1090
        %p1107 = scmp.eq.s32.totalorder %s962, 4
        %s1108 = scalar_select %p1107, 1, 0
        %v1109 = vstv %s1108
        %vm1110 = vcmp.eq.s32.totalorder %v1109, 1
        %1119 = vrot.lane.b32.xlu0 %v1099, 1
        %v1120 = vpop.permute.xlu0 %1119
        %1121 = vrot.lane.b32.xlu0 %v1100, 1
        %v1122 = vpop.permute.xlu0 %1121
        %1123 = vrot.lane.b32.xlu0 %v1101, 1
        %v1124 = vpop.permute.xlu0 %1123
        %1125 = vrot.lane.b32.xlu0 %v1102, 1
        %v1126 = vpop.permute.xlu0 %1125
        %1127 = vrot.lane.b32.xlu0 %v1103, 1
        %v1128 = vpop.permute.xlu0 %1127
        %1129 = vrot.lane.b32.xlu0 %v1104, 1
        %v1130 = vpop.permute.xlu0 %1129
        %1131 = vrot.lane.b32.xlu0 %v1105, 1
        %v1132 = vpop.permute.xlu0 %1131
        %1133 = vrot.lane.b32.xlu0 %v1106, 1
        %v1134 = vpop.permute.xlu0 %1133
        %v1143 = vsel %vm1110, %v967, %v1120
        %v1144 = vsel %vm1110, %v968, %v1122
        %v1145 = vsel %vm1110, %v969, %v1124
        %v1146 = vsel %vm1110, %v970, %v1126
        %v1147 = vsel %vm1110, %v971, %v1128
        %v1148 = vsel %vm1110, %v972, %v1130
        %v1149 = vsel %vm1110, %v973, %v1132
        %v1150 = vsel %vm1110, %v974, %v1134
        %p1151 = scmp.eq.s32.totalorder %s962, 5
        %s1152 = scalar_select %p1151, 1, 0
        %v1153 = vstv %s1152
        %vm1154 = vcmp.eq.s32.totalorder %v1153, 1
        %1163 = vrot.lane.b32.xlu0 %v1143, 1
        %v1164 = vpop.permute.xlu0 %1163
        %1165 = vrot.lane.b32.xlu0 %v1144, 1
        %v1166 = vpop.permute.xlu0 %1165
        %1167 = vrot.lane.b32.xlu0 %v1145, 1
        %v1168 = vpop.permute.xlu0 %1167
        %1169 = vrot.lane.b32.xlu0 %v1146, 1
        %v1170 = vpop.permute.xlu0 %1169
        %1171 = vrot.lane.b32.xlu0 %v1147, 1
        %v1172 = vpop.permute.xlu0 %1171
        %1173 = vrot.lane.b32.xlu0 %v1148, 1
        %v1174 = vpop.permute.xlu0 %1173
        %1175 = vrot.lane.b32.xlu0 %v1149, 1
        %v1176 = vpop.permute.xlu0 %1175
        %1177 = vrot.lane.b32.xlu0 %v1150, 1
        %v1178 = vpop.permute.xlu0 %1177
        %v1187 = vsel %vm1154, %v967, %v1164
        %v1188 = vsel %vm1154, %v968, %v1166
        %v1189 = vsel %vm1154, %v969, %v1168
        %v1190 = vsel %vm1154, %v970, %v1170
        %v1191 = vsel %vm1154, %v971, %v1172
        %v1192 = vsel %vm1154, %v972, %v1174
        %v1193 = vsel %vm1154, %v973, %v1176
        %v1194 = vsel %vm1154, %v974, %v1178
        %p1195 = scmp.eq.s32.totalorder %s962, 6
        %s1196 = scalar_select %p1195, 1, 0
        %v1197 = vstv %s1196
        %vm1198 = vcmp.eq.s32.totalorder %v1197, 1
        %1207 = vrot.lane.b32.xlu0 %v1187, 1
        %v1208 = vpop.permute.xlu0 %1207
        %1209 = vrot.lane.b32.xlu0 %v1188, 1
        %v1210 = vpop.permute.xlu0 %1209
        %1211 = vrot.lane.b32.xlu0 %v1189, 1
        %v1212 = vpop.permute.xlu0 %1211
        %1213 = vrot.lane.b32.xlu0 %v1190, 1
        %v1214 = vpop.permute.xlu0 %1213
        %1215 = vrot.lane.b32.xlu0 %v1191, 1
        %v1216 = vpop.permute.xlu0 %1215
        %1217 = vrot.lane.b32.xlu0 %v1192, 1
        %v1218 = vpop.permute.xlu0 %1217
        %1219 = vrot.lane.b32.xlu0 %v1193, 1
        %v1220 = vpop.permute.xlu0 %1219
        %1221 = vrot.lane.b32.xlu0 %v1194, 1
        %v1222 = vpop.permute.xlu0 %1221
        %v1231 = vsel %vm1198, %v967, %v1208
        %v1232 = vsel %vm1198, %v968, %v1210
        %v1233 = vsel %vm1198, %v969, %v1212
        %v1234 = vsel %vm1198, %v970, %v1214
        %v1235 = vsel %vm1198, %v971, %v1216
        %v1236 = vsel %vm1198, %v972, %v1218
        %v1237 = vsel %vm1198, %v973, %v1220
        %v1238 = vsel %vm1198, %v974, %v1222
        %p1239 = scmp.eq.s32.totalorder %s962, 7
        %s1240 = scalar_select %p1239, 1, 0
        %v1241 = vstv %s1240
        %vm1242 = vcmp.eq.s32.totalorder %v1241, 1
        %1251 = vrot.lane.b32.xlu0 %v1231, 1
        %v1252 = vpop.permute.xlu0 %1251
        %1253 = vrot.lane.b32.xlu0 %v1232, 1
        %v1254 = vpop.permute.xlu0 %1253
        %1255 = vrot.lane.b32.xlu0 %v1233, 1
        %v1256 = vpop.permute.xlu0 %1255
        %1257 = vrot.lane.b32.xlu0 %v1234, 1
        %v1258 = vpop.permute.xlu0 %1257
        %1259 = vrot.lane.b32.xlu0 %v1235, 1
        %v1260 = vpop.permute.xlu0 %1259
        %1261 = vrot.lane.b32.xlu0 %v1236, 1
        %v1262 = vpop.permute.xlu0 %1261
        %1263 = vrot.lane.b32.xlu0 %v1237, 1
        %v1264 = vpop.permute.xlu0 %1263
        %1265 = vrot.lane.b32.xlu0 %v1238, 1
        %v1266 = vpop.permute.xlu0 %1265
        %v1275 = vsel %vm1242, %v967, %v1252
        %v1276 = vsel %vm1242, %v968, %v1254
        %v1277 = vsel %vm1242, %v969, %v1256
        %v1278 = vsel %vm1242, %v970, %v1258
        %v1279 = vsel %vm1242, %v971, %v1260
        %v1280 = vsel %vm1242, %v972, %v1262
        %v1281 = vsel %vm1242, %v973, %v1264
        %v1282 = vsel %vm1242, %v974, %v1266
        %p1283 = scmp.eq.s32.totalorder %s962, 8
        %s1284 = scalar_select %p1283, 1, 0
        %v1285 = vstv %s1284
        %vm1286 = vcmp.eq.s32.totalorder %v1285, 1
        %1295 = vrot.lane.b32.xlu0 %v1275, 1
        %v1296 = vpop.permute.xlu0 %1295
        %1297 = vrot.lane.b32.xlu0 %v1276, 1
        %v1298 = vpop.permute.xlu0 %1297
        %1299 = vrot.lane.b32.xlu0 %v1277, 1
        %v1300 = vpop.permute.xlu0 %1299
        %1301 = vrot.lane.b32.xlu0 %v1278, 1
        %v1302 = vpop.permute.xlu0 %1301
        %1303 = vrot.lane.b32.xlu0 %v1279, 1
        %v1304 = vpop.permute.xlu0 %1303
        %1305 = vrot.lane.b32.xlu0 %v1280, 1
        %v1306 = vpop.permute.xlu0 %1305
        %1307 = vrot.lane.b32.xlu0 %v1281, 1
        %v1308 = vpop.permute.xlu0 %1307
        %1309 = vrot.lane.b32.xlu0 %v1282, 1
        %v1310 = vpop.permute.xlu0 %1309
        %v1319 = vsel %vm1286, %v967, %v1296
        %v1320 = vsel %vm1286, %v968, %v1298
        %v1321 = vsel %vm1286, %v969, %v1300
        %v1322 = vsel %vm1286, %v970, %v1302
        %v1323 = vsel %vm1286, %v971, %v1304
        %v1324 = vsel %vm1286, %v972, %v1306
        %v1325 = vsel %vm1286, %v973, %v1308
        %v1326 = vsel %vm1286, %v974, %v1310
        %1335 = vrot.lane.b32.xlu0 %v1319, 120
        %v1336 = vpop.permute.xlu0 %1335
        %1337 = vrot.lane.b32.xlu0 %v1320, 120
        %v1338 = vpop.permute.xlu0 %1337
        %1339 = vrot.lane.b32.xlu0 %v1321, 120
        %v1340 = vpop.permute.xlu0 %1339
        %1341 = vrot.lane.b32.xlu0 %v1322, 120
        %v1342 = vpop.permute.xlu0 %1341
        %1343 = vrot.lane.b32.xlu0 %v1323, 120
        %v1344 = vpop.permute.xlu0 %1343
        %1345 = vrot.lane.b32.xlu0 %v1324, 120
        %v1346 = vpop.permute.xlu0 %1345
        %1347 = vrot.lane.b32.xlu0 %v1325, 120
        %v1348 = vpop.permute.xlu0 %1347
        %1349 = vrot.lane.b32.xlu0 %v1326, 120
        %v1350 = vpop.permute.xlu0 %1349
        %s1359 = scalar_lea.vmem %s142, 128 [#allocation7]
        %1360 = vst.msk [vmem:[%s1359] sm:$0xff] %vm543, %v1336
        %1361 = vst.msk [vmem:[%s1359 + $0x8] sm:$0xff] %vm543, %v1338
        %1362 = vst.msk [vmem:[%s1359 + $0x10] sm:$0xff] %vm543, %v1340
        %1363 = vst.msk [vmem:[%s1359 + $0x18] sm:$0xff] %vm543, %v1342
        %1364 = vst.msk [vmem:[%s1359 + $0x20] sm:$0xff] %vm543, %v1344
        %1365 = vst.msk [vmem:[%s1359 + $0x28] sm:$0xff] %vm543, %v1346
        %1366 = vst.msk [vmem:[%s1359 + $0x30] sm:$0xff] %vm543, %v1348
        %1367 = vst.msk [vmem:[%s1359 + $0x38] sm:$0xff] %vm543, %v1350
        %s1368 = sadd.s32 %s145, 3
        %s1369 = smul.u32 %s1368, 128
        %s1370 = sld [smem:[#allocation3 + %s1369]]
        %s1371 = sadd.s32 %s1369, 1
        %s1372 = sld [smem:[#allocation3 + %s1371]]
        %s1373 = sadd.s32 %s1372, 288
        %s1374 = scalar_lea.vmem %s124, %s1373 [#allocation4]
        %v1375 = vld [vmem:[%s1374] sm:$0xff]
        %v1376 = vld [vmem:[%s1374 + $0x8] sm:$0xff]
        %v1377 = vld [vmem:[%s1374 + $0x18] sm:$0xff]
        %v1378 = vld [vmem:[%s1374 + $0x20] sm:$0xff]
        %v1379 = vld [vmem:[%s1374 + $0x30] sm:$0xff]
        %v1380 = vld [vmem:[%s1374 + $0x38] sm:$0xff]
        %v1381 = vld [vmem:[%s1374 + $0x48] sm:$0xff]
        %v1382 = vld [vmem:[%s1374 + $0x50] sm:$0xff]
        %p1383 = scmp.eq.s32.totalorder %s1370, 1
        %s1384 = scalar_select %p1383, 1, 0
        %v1385 = vstv %s1384
        %vm1386 = vcmp.eq.s32.totalorder %v1385, 1
        %1395 = vrot.lane.b32.xlu0 %v1375, 1
        %v1396 = vpop.permute.xlu0 %1395
        %1397 = vrot.lane.b32.xlu0 %v1376, 1
        %v1398 = vpop.permute.xlu0 %1397
        %1399 = vrot.lane.b32.xlu0 %v1377, 1
        %v1400 = vpop.permute.xlu0 %1399
        %1401 = vrot.lane.b32.xlu0 %v1378, 1
        %v1402 = vpop.permute.xlu0 %1401
        %1403 = vrot.lane.b32.xlu0 %v1379, 1
        %v1404 = vpop.permute.xlu0 %1403
        %1405 = vrot.lane.b32.xlu0 %v1380, 1
        %v1406 = vpop.permute.xlu0 %1405
        %1407 = vrot.lane.b32.xlu0 %v1381, 1
        %v1408 = vpop.permute.xlu0 %1407
        %1409 = vrot.lane.b32.xlu0 %v1382, 1
        %v1410 = vpop.permute.xlu0 %1409
        %v1419 = vsel %vm1386, %v1375, %v1396
        %v1420 = vsel %vm1386, %v1376, %v1398
        %v1421 = vsel %vm1386, %v1377, %v1400
        %v1422 = vsel %vm1386, %v1378, %v1402
        %v1423 = vsel %vm1386, %v1379, %v1404
        %v1424 = vsel %vm1386, %v1380, %v1406
        %v1425 = vsel %vm1386, %v1381, %v1408
        %v1426 = vsel %vm1386, %v1382, %v1410
        %p1427 = scmp.eq.s32.totalorder %s1370, 2
        %s1428 = scalar_select %p1427, 1, 0
        %v1429 = vstv %s1428
        %vm1430 = vcmp.eq.s32.totalorder %v1429, 1
        %1439 = vrot.lane.b32.xlu0 %v1419, 1
        %v1440 = vpop.permute.xlu0 %1439
        %1441 = vrot.lane.b32.xlu0 %v1420, 1
        %v1442 = vpop.permute.xlu0 %1441
        %1443 = vrot.lane.b32.xlu0 %v1421, 1
        %v1444 = vpop.permute.xlu0 %1443
        %1445 = vrot.lane.b32.xlu0 %v1422, 1
        %v1446 = vpop.permute.xlu0 %1445
        %1447 = vrot.lane.b32.xlu0 %v1423, 1
        %v1448 = vpop.permute.xlu0 %1447
        %1449 = vrot.lane.b32.xlu0 %v1424, 1
        %v1450 = vpop.permute.xlu0 %1449
        %1451 = vrot.lane.b32.xlu0 %v1425, 1
        %v1452 = vpop.permute.xlu0 %1451
        %1453 = vrot.lane.b32.xlu0 %v1426, 1
        %v1454 = vpop.permute.xlu0 %1453
        %v1463 = vsel %vm1430, %v1375, %v1440
        %v1464 = vsel %vm1430, %v1376, %v1442
        %v1465 = vsel %vm1430, %v1377, %v1444
        %v1466 = vsel %vm1430, %v1378, %v1446
        %v1467 = vsel %vm1430, %v1379, %v1448
        %v1468 = vsel %vm1430, %v1380, %v1450
        %v1469 = vsel %vm1430, %v1381, %v1452
        %v1470 = vsel %vm1430, %v1382, %v1454
        %p1471 = scmp.eq.s32.totalorder %s1370, 3
        %s1472 = scalar_select %p1471, 1, 0
        %v1473 = vstv %s1472
        %vm1474 = vcmp.eq.s32.totalorder %v1473, 1
        %1483 = vrot.lane.b32.xlu0 %v1463, 1
        %v1484 = vpop.permute.xlu0 %1483
        %1485 = vrot.lane.b32.xlu0 %v1464, 1
        %v1486 = vpop.permute.xlu0 %1485
        %1487 = vrot.lane.b32.xlu0 %v1465, 1
        %v1488 = vpop.permute.xlu0 %1487
        %1489 = vrot.lane.b32.xlu0 %v1466, 1
        %v1490 = vpop.permute.xlu0 %1489
        %1491 = vrot.lane.b32.xlu0 %v1467, 1
        %v1492 = vpop.permute.xlu0 %1491
        %1493 = vrot.lane.b32.xlu0 %v1468, 1
        %v1494 = vpop.permute.xlu0 %1493
        %1495 = vrot.lane.b32.xlu0 %v1469, 1
        %v1496 = vpop.permute.xlu0 %1495
        %1497 = vrot.lane.b32.xlu0 %v1470, 1
        %v1498 = vpop.permute.xlu0 %1497
        %v1507 = vsel %vm1474, %v1375, %v1484
        %v1508 = vsel %vm1474, %v1376, %v1486
        %v1509 = vsel %vm1474, %v1377, %v1488
        %v1510 = vsel %vm1474, %v1378, %v1490
        %v1511 = vsel %vm1474, %v1379, %v1492
        %v1512 = vsel %vm1474, %v1380, %v1494
        %v1513 = vsel %vm1474, %v1381, %v1496
        %v1514 = vsel %vm1474, %v1382, %v1498
        %p1515 = scmp.eq.s32.totalorder %s1370, 4
        %s1516 = scalar_select %p1515, 1, 0
        %v1517 = vstv %s1516
        %vm1518 = vcmp.eq.s32.totalorder %v1517, 1
        %1527 = vrot.lane.b32.xlu0 %v1507, 1
        %v1528 = vpop.permute.xlu0 %1527
        %1529 = vrot.lane.b32.xlu0 %v1508, 1
        %v1530 = vpop.permute.xlu0 %1529
        %1531 = vrot.lane.b32.xlu0 %v1509, 1
        %v1532 = vpop.permute.xlu0 %1531
        %1533 = vrot.lane.b32.xlu0 %v1510, 1
        %v1534 = vpop.permute.xlu0 %1533
        %1535 = vrot.lane.b32.xlu0 %v1511, 1
        %v1536 = vpop.permute.xlu0 %1535
        %1537 = vrot.lane.b32.xlu0 %v1512, 1
        %v1538 = vpop.permute.xlu0 %1537
        %1539 = vrot.lane.b32.xlu0 %v1513, 1
        %v1540 = vpop.permute.xlu0 %1539
        %1541 = vrot.lane.b32.xlu0 %v1514, 1
        %v1542 = vpop.permute.xlu0 %1541
        %v1551 = vsel %vm1518, %v1375, %v1528
        %v1552 = vsel %vm1518, %v1376, %v1530
        %v1553 = vsel %vm1518, %v1377, %v1532
        %v1554 = vsel %vm1518, %v1378, %v1534
        %v1555 = vsel %vm1518, %v1379, %v1536
        %v1556 = vsel %vm1518, %v1380, %v1538
        %v1557 = vsel %vm1518, %v1381, %v1540
        %v1558 = vsel %vm1518, %v1382, %v1542
        %p1559 = scmp.eq.s32.totalorder %s1370, 5
        %s1560 = scalar_select %p1559, 1, 0
        %v1561 = vstv %s1560
        %vm1562 = vcmp.eq.s32.totalorder %v1561, 1
        %1571 = vrot.lane.b32.xlu0 %v1551, 1
        %v1572 = vpop.permute.xlu0 %1571
        %1573 = vrot.lane.b32.xlu0 %v1552, 1
        %v1574 = vpop.permute.xlu0 %1573
        %1575 = vrot.lane.b32.xlu0 %v1553, 1
        %v1576 = vpop.permute.xlu0 %1575
        %1577 = vrot.lane.b32.xlu0 %v1554, 1
        %v1578 = vpop.permute.xlu0 %1577
        %1579 = vrot.lane.b32.xlu0 %v1555, 1
        %v1580 = vpop.permute.xlu0 %1579
        %1581 = vrot.lane.b32.xlu0 %v1556, 1
        %v1582 = vpop.permute.xlu0 %1581
        %1583 = vrot.lane.b32.xlu0 %v1557, 1
        %v1584 = vpop.permute.xlu0 %1583
        %1585 = vrot.lane.b32.xlu0 %v1558, 1
        %v1586 = vpop.permute.xlu0 %1585
        %v1595 = vsel %vm1562, %v1375, %v1572
        %v1596 = vsel %vm1562, %v1376, %v1574
        %v1597 = vsel %vm1562, %v1377, %v1576
        %v1598 = vsel %vm1562, %v1378, %v1578
        %v1599 = vsel %vm1562, %v1379, %v1580
        %v1600 = vsel %vm1562, %v1380, %v1582
        %v1601 = vsel %vm1562, %v1381, %v1584
        %v1602 = vsel %vm1562, %v1382, %v1586
        %p1603 = scmp.eq.s32.totalorder %s1370, 6
        %s1604 = scalar_select %p1603, 1, 0
        %v1605 = vstv %s1604
        %vm1606 = vcmp.eq.s32.totalorder %v1605, 1
        %1615 = vrot.lane.b32.xlu0 %v1595, 1
        %v1616 = vpop.permute.xlu0 %1615
        %1617 = vrot.lane.b32.xlu0 %v1596, 1
        %v1618 = vpop.permute.xlu0 %1617
        %1619 = vrot.lane.b32.xlu0 %v1597, 1
        %v1620 = vpop.permute.xlu0 %1619
        %1621 = vrot.lane.b32.xlu0 %v1598, 1
        %v1622 = vpop.permute.xlu0 %1621
        %1623 = vrot.lane.b32.xlu0 %v1599, 1
        %v1624 = vpop.permute.xlu0 %1623
        %1625 = vrot.lane.b32.xlu0 %v1600, 1
        %v1626 = vpop.permute.xlu0 %1625
        %1627 = vrot.lane.b32.xlu0 %v1601, 1
        %v1628 = vpop.permute.xlu0 %1627
        %1629 = vrot.lane.b32.xlu0 %v1602, 1
        %v1630 = vpop.permute.xlu0 %1629
        %v1639 = vsel %vm1606, %v1375, %v1616
        %v1640 = vsel %vm1606, %v1376, %v1618
        %v1641 = vsel %vm1606, %v1377, %v1620
        %v1642 = vsel %vm1606, %v1378, %v1622
        %v1643 = vsel %vm1606, %v1379, %v1624
        %v1644 = vsel %vm1606, %v1380, %v1626
        %v1645 = vsel %vm1606, %v1381, %v1628
        %v1646 = vsel %vm1606, %v1382, %v1630
        %p1647 = scmp.eq.s32.totalorder %s1370, 7
        %s1648 = scalar_select %p1647, 1, 0
        %v1649 = vstv %s1648
        %vm1650 = vcmp.eq.s32.totalorder %v1649, 1
        %1659 = vrot.lane.b32.xlu0 %v1639, 1
        %v1660 = vpop.permute.xlu0 %1659
        %1661 = vrot.lane.b32.xlu0 %v1640, 1
        %v1662 = vpop.permute.xlu0 %1661
        %1663 = vrot.lane.b32.xlu0 %v1641, 1
        %v1664 = vpop.permute.xlu0 %1663
        %1665 = vrot.lane.b32.xlu0 %v1642, 1
        %v1666 = vpop.permute.xlu0 %1665
        %1667 = vrot.lane.b32.xlu0 %v1643, 1
        %v1668 = vpop.permute.xlu0 %1667
        %1669 = vrot.lane.b32.xlu0 %v1644, 1
        %v1670 = vpop.permute.xlu0 %1669
        %1671 = vrot.lane.b32.xlu0 %v1645, 1
        %v1672 = vpop.permute.xlu0 %1671
        %1673 = vrot.lane.b32.xlu0 %v1646, 1
        %v1674 = vpop.permute.xlu0 %1673
        %v1683 = vsel %vm1650, %v1375, %v1660
        %v1684 = vsel %vm1650, %v1376, %v1662
        %v1685 = vsel %vm1650, %v1377, %v1664
        %v1686 = vsel %vm1650, %v1378, %v1666
        %v1687 = vsel %vm1650, %v1379, %v1668
        %v1688 = vsel %vm1650, %v1380, %v1670
        %v1689 = vsel %vm1650, %v1381, %v1672
        %v1690 = vsel %vm1650, %v1382, %v1674
        %p1691 = scmp.eq.s32.totalorder %s1370, 8
        %s1692 = scalar_select %p1691, 1, 0
        %v1693 = vstv %s1692
        %vm1694 = vcmp.eq.s32.totalorder %v1693, 1
        %1703 = vrot.lane.b32.xlu0 %v1683, 1
        %v1704 = vpop.permute.xlu0 %1703
        %1705 = vrot.lane.b32.xlu0 %v1684, 1
        %v1706 = vpop.permute.xlu0 %1705
        %1707 = vrot.lane.b32.xlu0 %v1685, 1
        %v1708 = vpop.permute.xlu0 %1707
        %1709 = vrot.lane.b32.xlu0 %v1686, 1
        %v1710 = vpop.permute.xlu0 %1709
        %1711 = vrot.lane.b32.xlu0 %v1687, 1
        %v1712 = vpop.permute.xlu0 %1711
        %1713 = vrot.lane.b32.xlu0 %v1688, 1
        %v1714 = vpop.permute.xlu0 %1713
        %1715 = vrot.lane.b32.xlu0 %v1689, 1
        %v1716 = vpop.permute.xlu0 %1715
        %1717 = vrot.lane.b32.xlu0 %v1690, 1
        %v1718 = vpop.permute.xlu0 %1717
        %v1727 = vsel %vm1694, %v1375, %v1704
        %v1728 = vsel %vm1694, %v1376, %v1706
        %v1729 = vsel %vm1694, %v1377, %v1708
        %v1730 = vsel %vm1694, %v1378, %v1710
        %v1731 = vsel %vm1694, %v1379, %v1712
        %v1732 = vsel %vm1694, %v1380, %v1714
        %v1733 = vsel %vm1694, %v1381, %v1716
        %v1734 = vsel %vm1694, %v1382, %v1718
        %1743 = vrot.lane.b32.xlu0 %v1727, 120
        %v1744 = vpop.permute.xlu0 %1743
        %1745 = vrot.lane.b32.xlu0 %v1728, 120
        %v1746 = vpop.permute.xlu0 %1745
        %1747 = vrot.lane.b32.xlu0 %v1729, 120
        %v1748 = vpop.permute.xlu0 %1747
        %1749 = vrot.lane.b32.xlu0 %v1730, 120
        %v1750 = vpop.permute.xlu0 %1749
        %1751 = vrot.lane.b32.xlu0 %v1731, 120
        %v1752 = vpop.permute.xlu0 %1751
        %1753 = vrot.lane.b32.xlu0 %v1732, 120
        %v1754 = vpop.permute.xlu0 %1753
        %1755 = vrot.lane.b32.xlu0 %v1733, 120
        %v1756 = vpop.permute.xlu0 %1755
        %1757 = vrot.lane.b32.xlu0 %v1734, 120
        %v1758 = vpop.permute.xlu0 %1757
        %s1767 = scalar_lea.vmem %s142, 192 [#allocation7]
        %1768 = vst.msk [vmem:[%s1767] sm:$0xff] %vm543, %v1744
        %1769 = vst.msk [vmem:[%s1767 + $0x8] sm:$0xff] %vm543, %v1746
        %1770 = vst.msk [vmem:[%s1767 + $0x10] sm:$0xff] %vm543, %v1748
        %1771 = vst.msk [vmem:[%s1767 + $0x18] sm:$0xff] %vm543, %v1750
        %1772 = vst.msk [vmem:[%s1767 + $0x20] sm:$0xff] %vm543, %v1752
        %1773 = vst.msk [vmem:[%s1767 + $0x28] sm:$0xff] %vm543, %v1754
        %1774 = vst.msk [vmem:[%s1767 + $0x30] sm:$0xff] %vm543, %v1756
        %1775 = vst.msk [vmem:[%s1767 + $0x38] sm:$0xff] %vm543, %v1758
        %s1776 = sand.u32 %s59, 1
        %s1777 = scalar_lea.sflag [#allocation6], %s1776
        %s1778 = sand.u32 %s59, 1
        %s1779 = smul.addr %s1778, 256
        %s1780 = scalar_lea.vmem [#allocation7], %s1779
        // Predicated region
        $region29: #{tpu_custom_call.1} parent=23 // pred_check
          %p1781 = pneg %p69
        $region30: #{tpu_custom_call.1} parent=23 // pred_check_branch
          %1783 = sbr.rel (%p1781) target = $region32
        $region31: #{tpu_custom_call.1} parent=23 // pred_region
          %s1784 = smul.u32 4, %s25
          %s1786 = ssub.s32 4096, 4096
          %1787 = vsyncadd %s1777, %s1786
          %s1788 = smul.addr %s1784, 8
          %s1789 = smul.addr %s1788, 128
          %s1790 = scalar_lea.hbm %s2, %s1789
          %s1791 = sshll.u32 %s1780, 4
          %s1792 = int_to_ptr.vmem [resolvable:$true] %s1791
          %1797 = dma.vmem_to_hbm [thread:$0]  %s1792, 4096, %s1790, %s1777, 128, 128, 8
        $region32: #{tpu_custom_call.1} parent=23 // pred_fallthru
          _
      $region24: #{tpu_custom_call.1} parent=5 // pred_fallthru
        _
      %p1798 = scmp.le.s32.totalorder 2, %s20
      // Predicated region
      $region33: #{tpu_custom_call.1} parent=5 // pred_check
        %p1799 = pneg %p1798
      $region34: #{tpu_custom_call.1} parent=5 // pred_check_branch
        %1801 = sbr.rel (%p1799) target = $region36
      $region35: #{tpu_custom_call.1} parent=5 // pred_region
        %s1802 = ssub.s32 %s20, 2
        // Predicated region
        $region37: #{tpu_custom_call.1} parent=35 // pred_check
          %p1803 = pneg %p75
        $region38: #{tpu_custom_call.1} parent=35 // pred_check_branch
          %1805 = sbr.rel (%p1803) target = $region40
        $region39: #{tpu_custom_call.1} parent=35 // pred_region
          %s1806 = sand.u32 %s60, 1
          %s1807 = scalar_lea.sflag [#allocation6], %s1806
          %s1808 = sand.u32 %s60, 1
          %s1809 = smul.addr %s1808, 256
          %s1810 = scalar_lea.vmem [#allocation7], %s1809
          %1811 = dma.done %s1807, 4096
        $region40: #{tpu_custom_call.1} parent=35 // pred_fallthru
          _
      $region36: #{tpu_custom_call.1} parent=5 // pred_fallthru
        _
    $region6: #{tpu_custom_call.1} parent=1 // loop_footer
      %s24 = sadd.s32 1, %s20
    $region7: #{tpu_custom_call.1} parent=1 // loop_footer_branch
      %19 = sbr.rel target = $region3
    $region8: #{tpu_custom_call.1} parent=1 // loop_exit
      _
    %1812 = vsyncpa [#allocation5], 1
    %s1813 = scalar_lea.sflag [#allocation5], 1
    %1814 = vsyncpa %s1813, 1
    %1815 = vsyncpa [#allocation6], 1
    %s1816 = scalar_lea.sflag [#allocation6], 1
    %1817 = vsyncpa %s1816, 1

</llo_original>
